<compile_context>
chip_gen: v7x
topology: tpu7x:2x2x1
jax: 0.10.0
libtpu: 0.0.40
codegen_flags: <defaults>
</compile_context>

<pallas_src>
import functools

import jax
import jax.numpy as jnp
from jax.experimental import pallas as pl
from jax.experimental.pallas import tpu as pltpu

# MXU input dtype for the three convolutions (f32 accumulation is always used).
MXU_DTYPE = jnp.bfloat16


# ---------------------------------------------------------------------------
# Fused kernel: one grid step = one batch sample, folded (H, W*C) layout.
# ---------------------------------------------------------------------------
def _cond_res_block_kernel(x_ref, y_ref,
                           w1_ref, b1_ref, lw1_ref, lb1_ref, g1_ref, be1_ref,
                           w2_ref, b2_ref, lw2_ref, lb2_ref, g2_ref, be2_ref,
                           wd_ref, bd_ref,
                           pg_ref, pgt_ref, pr_ref, pc_ref,
                           o_ref, *, H, WC, inv_n_per_group):
    f32 = jnp.float32
    xf = x_ref[0]            # (H, W*C)  f32, folded layout: lane = j*C + c
    yv = y_ref[0]            # (1, CL)   f32

    def conv3x3(h, w_ref, b_ref):
        # 3x3 "same" conv as a single banded matmul.
        # Height halo: two sublane shifts (zero rows), built directly in bf16;
        # width halo: encoded in the banded weight w_ref.
        hb = h.astype(w_ref.dtype)                              # cast once (H, WC)
        z = jnp.zeros((1, hb.shape[1]), hb.dtype)
        up = jnp.concatenate([z, hb[:H - 1, :]], axis=0)        # row i holds h[i-1]
        dn = jnp.concatenate([hb[1:, :], z], axis=0)            # row i holds h[i+1]
        cat = jnp.concatenate([up, hb, dn], axis=1)             # (H, 3*W*Cin) bf16
        return jnp.dot(cat, w_ref[...], preferred_element_type=f32) + b_ref[...]

    def group_norm(h, gamma_f, beta_f):
        # Per-sample GroupNorm in folded layout.  pg: (W*C, G) lane->group one-hot,
        # pgt: (G, W*C) broadcast-back.  Stats over H*W*(C/G) elements per group.
        # Single pass: [sum(h); sum(h*h)] stacked -> one matmul pair for mean & E[x^2].
        s = jnp.concatenate([jnp.sum(h, axis=0, keepdims=True),
                             jnp.sum(h * h, axis=0, keepdims=True)], axis=0)   # (2, W*C)
        stats = jnp.dot(jnp.dot(s, pg_ref[...], preferred_element_type=f32)
                        * inv_n_per_group,
                        pgt_ref[...], preferred_element_type=f32)              # (2, W*C)
        mean = stats[0:1, :]
        var = stats[1:2, :] - mean * mean
        return (h - mean) * jax.lax.rsqrt(var + 1e-5) * gamma_f + beta_f

    def film(h, lw_ref, lb_ref):
        # y @ lwf + lbf directly produces [gain | bias] already broadcast-expanded
        # to the folded (W*C) lane layout (expansion folded into the weights).
        lat = jnp.dot(yv, lw_ref[...], preferred_element_type=f32) + lb_ref[...]  # (1, 2*W*C)
        return lat[:, :WC] * h + lat[:, WC:]

    swish = lambda t: t * jax.nn.sigmoid(t)

    h = swish(film(group_norm(conv3x3(xf, w1_ref, b1_ref),
                              g1_ref[...], be1_ref[...]), lw1_ref, lb1_ref))
    h = swish(film(group_norm(conv3x3(h, w2_ref, b2_ref),
                              g2_ref[...], be2_ref[...]), lw2_ref, lb2_ref))
    r = xf + h                                                    # residual
    d = conv3x3(r, wd_ref, bd_ref)                                # (H, W*2C)

    # AvgPool2d(3, stride=2, padding=1, count_include_pad=True) as two matmuls:
    #   rows:   (Ho, H)      selection  @ d            -> (Ho, W*2C)
    #   cols:   row-pooled   @ (W*2C, Wo*2C) selection -> (Ho, Wo*2C)   (lane-dense)
    pooled = jnp.dot(jnp.dot(pr_ref[...], d, preferred_element_type=f32),
                     pc_ref[...], preferred_element_type=f32) * (1.0 / 9.0)
    o_ref[0] = swish(pooled).astype(o_ref.dtype)


# ---------------------------------------------------------------------------
# Wrapper-side constant folding (pure JAX, done once per call).
# ---------------------------------------------------------------------------
def _fold_conv_weight(w, W):
    """(3,3,Cin,Cout) HWIO -> banded (3*W*Cin, W*Cout) matrix for the folded layout."""
    jj = jnp.arange(W)[:, None]
    j = jnp.arange(W)[None, :]
    dx = jj - j + 1                                   # tap index along width
    valid = (dx >= 0) & (dx <= 2)                     # also encodes width zero-padding
    dxc = jnp.clip(dx, 0, 2)
    wg = w[:, dxc, :, :]                              # (3, W, W, Cin, Cout)
    wg = jnp.where(valid[None, :, :, None, None], wg, 0.0)
    wf = jnp.transpose(wg, (0, 1, 3, 2, 4))           # (3, W, Cin, W, Cout)
    return wf.reshape(3 * W * w.shape[2], W * w.shape[3])


def cond_res_block(x_nchw, y, p, groups):
    B, C, H, W = x_nchw.shape
    C2 = 2 * C
    G = groups
    cpg = C // G
    Ho, Wo = H // 2, W // 2
    CL = y.shape[1]
    WC, WC2 = W * C, W * C2
    f32 = jnp.float32

    # Layout glue: NCHW -> folded (B, H, W*C); y -> (B, 1, CL).
    xf = jnp.transpose(x_nchw, (0, 2, 3, 1)).astype(f32).reshape(B, H, WC)
    y3 = y.astype(f32).reshape(B, 1, CL)

    tile = lambda v: jnp.tile(v.astype(f32), (W,)).reshape(1, -1)   # (C,)->(1, W*C)

    # Banded conv weights (bf16 for the MXU) + folded per-channel biases.
    w1 = _fold_conv_weight(p["c1w"].astype(f32), W).astype(MXU_DTYPE)
    w2 = _fold_conv_weight(p["c2w"].astype(f32), W).astype(MXU_DTYPE)
    wd = _fold_conv_weight(p["cdw"].astype(f32), W).astype(MXU_DTYPE)
    b1f, b2f, bdf = tile(p["c1b"]), tile(p["c2b"]), tile(p["cdb"])

    # FiLM linears with the per-channel -> folded-lane expansion folded into the weights.
    def fold_film(lw, lb):
        lwf = jnp.concatenate([jnp.tile(lw[:, :C].astype(f32), (1, W)),
                               jnp.tile(lw[:, C:].astype(f32), (1, W))], axis=1)
        lbf = jnp.concatenate([tile(lb[:C]), tile(lb[C:])], axis=1)
        return lwf, lbf                                 # (CL, 2*W*C), (1, 2*W*C)
    lw1f, lb1f = fold_film(p["lw1"], p["lb1"])
    lw2f, lb2f = fold_film(p["lw2"], p["lb2"])

    # GroupNorm affine (folded) and lane->group one-hot matrices (hoisted constants).
    g1f, be1f = tile(p["gn1w"]), tile(p["gn1b"])
    g2f, be2f = tile(p["gn2w"]), tile(p["gn2b"])
    lane_g = (jnp.arange(WC) % C) // cpg
    pg = (lane_g[:, None] == jnp.arange(G)[None, :]).astype(f32)    # (W*C, G)
    pgt = pg.T                                                      # (G, W*C)

    # AvgPool selection matrices (window {2i-1, 2i, 2i+1} clipped to the image).
    r_i = jnp.arange(H)[None, :]
    o_i = jnp.arange(Ho)[:, None]
    pr = ((r_i >= 2 * o_i - 1) & (r_i <= 2 * o_i + 1)).astype(f32)  # (Ho, H)
    jc = jnp.arange(W)[:, None]
    jo = jnp.arange(Wo)[None, :]
    sel = ((jc >= 2 * jo - 1) & (jc <= 2 * jo + 1)).astype(f32)     # (W, Wo)
    pc = (sel[:, None, :, None] *
          jnp.eye(C2, dtype=f32)[None, :, None, :]).reshape(WC2, Wo * C2)

    kern = functools.partial(_cond_res_block_kernel,
                             H=H, WC=WC, inv_n_per_group=1.0 / float(H * W * cpg))

    const = lambda s: pl.BlockSpec(s, lambda b, _n=len(s): (0,) * _n)
    args = (xf, y3, w1, b1f, lw1f, lb1f, g1f, be1f,
            w2, b2f, lw2f, lb2f, g2f, be2f, wd, bdf, pg, pgt, pr, pc)
    in_specs = [pl.BlockSpec((1, H, WC), lambda b: (b, 0, 0)),
                pl.BlockSpec((1, 1, CL), lambda b: (b, 0, 0))]
    in_specs += [const(a.shape) for a in args[2:]]

    out = pl.pallas_call(
        kern,
        out_shape=jax.ShapeDtypeStruct((B, Ho, Wo * C2), f32),
        grid=(B,),
        in_specs=in_specs,
        out_specs=pl.BlockSpec((1, Ho, Wo * C2), lambda b: (b, 0, 0)),
        compiler_params=pltpu.CompilerParams(
            dimension_semantics=("parallel",),          # shards over v7x's 2 TCs
            vmem_limit_bytes=32 * 1024 * 1024),
    )(*args)

    # Unfold lanes (jo*C2 + c) and go back to NCHW.
    return jnp.transpose(out.reshape(B, Ho, Wo, C2), (0, 3, 1, 2))


# ---------------------------------------------------------------------------
# Pure-JAX reference (module semantics, for correctness checking)
# ---------------------------------------------------------------------------
def ref_forward(x_nchw, y, p, groups):
    x = jnp.transpose(x_nchw, (0, 2, 3, 1)).astype(jnp.float32)

    def conv(h, w, b):  # w: (3, 3, Cin, Cout)
        return jax.lax.conv_general_dilated(
            h, w, (1, 1), ((1, 1), (1, 1)),
            dimension_numbers=("NHWC", "HWIO", "NHWC")) + b

    def gn(h, weight, bias):
        Bb, Hh, Ww, Cc = h.shape
        hg = h.reshape(Bb, Hh, Ww, groups, Cc // groups)
        m = hg.mean(axis=(1, 2, 4), keepdims=True)
        v = ((hg - m) ** 2).mean(axis=(1, 2, 4), keepdims=True)
        hn = ((hg - m) * jax.lax.rsqrt(v + 1e-5)).reshape(Bb, Hh, Ww, Cc)
        return hn * weight + bias

    def film(h, lw, lb):
        lat = y.astype(jnp.float32) @ lw + lb
        Cc = h.shape[-1]
        return lat[:, :Cc][:, None, None, :] * h + lat[:, Cc:][:, None, None, :]

    sw = lambda t: t * jax.nn.sigmoid(t)

    h = sw(film(gn(conv(x, p["c1w"], p["c1b"]), p["gn1w"], p["gn1b"]), p["lw1"], p["lb1"]))
    h = sw(film(gn(conv(h, p["c2w"], p["c2b"]), p["gn2w"], p["gn2b"]), p["lw2"], p["lb2"]))
    r = x + h
    d = conv(r, p["cdw"], p["cdb"])
    dsum = jax.lax.reduce_window(d, 0.0, jax.lax.add, (1, 3, 3, 1), (1, 2, 2, 1),
                                 [(0, 0), (1, 1), (1, 1), (0, 0)])
    out = sw(dsum / 9.0)
    return jnp.transpose(out, (0, 3, 1, 2))


def init_params(key, C, CL):
    ks = jax.random.split(key, 14)

    def nrm(k, shape, s=0.1):
        return (s * jax.random.normal(k, shape)).astype(jnp.float32)

    return dict(
        lw1=nrm(ks[0], (CL, 2 * C)), lb1=nrm(ks[1], (2 * C,)),
        lw2=nrm(ks[2], (CL, 2 * C)), lb2=nrm(ks[3], (2 * C,)),
        c1w=nrm(ks[4], (3, 3, C, C)), c1b=nrm(ks[5], (C,)),
        c2w=nrm(ks[6], (3, 3, C, C)), c2b=nrm(ks[7], (C,)),
        gn1w=(1.0 + nrm(ks[8], (C,))).astype(jnp.float32), gn1b=nrm(ks[9], (C,)),
        gn2w=(1.0 + nrm(ks[10], (C,))).astype(jnp.float32), gn2b=nrm(ks[11], (C,)),
        cdw=nrm(ks[12], (3, 3, C, 2 * C)), cdb=nrm(ks[13], (2 * C,)),
    )


if __name__ == "__main__":
    # Small shapes consistent with the module: filters=8, im_size=16, classes=32.
    B, C, H, W, CL = 2, 8, 16, 16, 32
    groups = int(C / 128 * 32)  # GroupNorm(int(filters/128*32), filters) -> 2

    key = jax.random.PRNGKey(0)
    kx, ky, kp = jax.random.split(key, 3)
    x = jax.random.normal(kx, (B, C, H, W), jnp.float32)  # NCHW, like PyTorch
    y = jax.random.normal(ky, (B, CL), jnp.float32)
    params = init_params(kp, C, CL)

    fwd = jax.jit(cond_res_block, static_argnums=(3,))
    out = jax.block_until_ready(fwd(x, y, params, groups))
    ref = jax.block_until_ready(ref_forward(x, y, params, groups))

    assert out.shape == (B, 2 * C, H // 2, W // 2), out.shape
    max_err = float(jnp.max(jnp.abs(out - ref)))
    # Tolerance accounts for bf16 MXU inputs on the three convolutions (f32 accum).
    assert jnp.allclose(out, ref, rtol=3e-2, atol=3e-2), f"max abs err = {max_err}"
    print("KERNEL_OK")
</pallas_src>

<mosaic_0001>
module attributes {stable_mosaic.version = 11 : i64} {
  func.func @_cond_res_block_kernel(%arg0: i32, %arg1: memref<1x16x128xf32, #tpu.memory_space<vmem>>, %arg2: memref<1x1x32xf32, #tpu.memory_space<vmem>>, %arg3: memref<384x128xbf16, #tpu.memory_space<vmem>>, %arg4: memref<1x128xf32, #tpu.memory_space<vmem>>, %arg5: memref<32x256xf32, #tpu.memory_space<vmem>>, %arg6: memref<1x256xf32, #tpu.memory_space<vmem>>, %arg7: memref<1x128xf32, #tpu.memory_space<vmem>>, %arg8: memref<1x128xf32, #tpu.memory_space<vmem>>, %arg9: memref<384x128xbf16, #tpu.memory_space<vmem>>, %arg10: memref<1x128xf32, #tpu.memory_space<vmem>>, %arg11: memref<32x256xf32, #tpu.memory_space<vmem>>, %arg12: memref<1x256xf32, #tpu.memory_space<vmem>>, %arg13: memref<1x128xf32, #tpu.memory_space<vmem>>, %arg14: memref<1x128xf32, #tpu.memory_space<vmem>>, %arg15: memref<384x256xbf16, #tpu.memory_space<vmem>>, %arg16: memref<1x256xf32, #tpu.memory_space<vmem>>, %arg17: memref<128x2xf32, #tpu.memory_space<vmem>>, %arg18: memref<2x128xf32, #tpu.memory_space<vmem>>, %arg19: memref<8x16xf32, #tpu.memory_space<vmem>>, %arg20: memref<256x128xf32, #tpu.memory_space<vmem>>, %arg21: memref<1x8x128xf32, #tpu.memory_space<vmem>>) attributes {dimension_semantics = [#tpu.dimension_semantics<parallel>], iteration_bounds = array<i64: 2>, scalar_prefetch = 0 : i64, scratch_operands = 0 : i64, tpu.core_type = #tpu.core_type<tc>, window_params = [{transform_indices = @transform_0, window_bounds = array<i64: 1, 16, 128>}, {transform_indices = @transform_1, window_bounds = array<i64: 1, 1, 32>}, {pipeline_mode = #tpu.pipeline_mode<synchronous>, transform_indices = @transform_2, window_bounds = array<i64: 384, 128>}, {pipeline_mode = #tpu.pipeline_mode<synchronous>, transform_indices = @transform_3, window_bounds = array<i64: 1, 128>}, {pipeline_mode = #tpu.pipeline_mode<synchronous>, transform_indices = @transform_4, window_bounds = array<i64: 32, 256>}, {pipeline_mode = #tpu.pipeline_mode<synchronous>, transform_indices = @transform_5, window_bounds = array<i64: 1, 256>}, {pipeline_mode = #tpu.pipeline_mode<synchronous>, transform_indices = @transform_6, window_bounds = array<i64: 1, 128>}, {pipeline_mode = #tpu.pipeline_mode<synchronous>, transform_indices = @transform_7, window_bounds = array<i64: 1, 128>}, {pipeline_mode = #tpu.pipeline_mode<synchronous>, transform_indices = @transform_8, window_bounds = array<i64: 384, 128>}, {pipeline_mode = #tpu.pipeline_mode<synchronous>, transform_indices = @transform_9, window_bounds = array<i64: 1, 128>}, {pipeline_mode = #tpu.pipeline_mode<synchronous>, transform_indices = @transform_10, window_bounds = array<i64: 32, 256>}, {pipeline_mode = #tpu.pipeline_mode<synchronous>, transform_indices = @transform_11, window_bounds = array<i64: 1, 256>}, {pipeline_mode = #tpu.pipeline_mode<synchronous>, transform_indices = @transform_12, window_bounds = array<i64: 1, 128>}, {pipeline_mode = #tpu.pipeline_mode<synchronous>, transform_indices = @transform_13, window_bounds = array<i64: 1, 128>}, {pipeline_mode = #tpu.pipeline_mode<synchronous>, transform_indices = @transform_14, window_bounds = array<i64: 384, 256>}, {pipeline_mode = #tpu.pipeline_mode<synchronous>, transform_indices = @transform_15, window_bounds = array<i64: 1, 256>}, {pipeline_mode = #tpu.pipeline_mode<synchronous>, transform_indices = @transform_16, window_bounds = array<i64: 128, 2>}, {pipeline_mode = #tpu.pipeline_mode<synchronous>, transform_indices = @transform_17, window_bounds = array<i64: 2, 128>}, {pipeline_mode = #tpu.pipeline_mode<synchronous>, transform_indices = @transform_18, window_bounds = array<i64: 8, 16>}, {pipeline_mode = #tpu.pipeline_mode<synchronous>, transform_indices = @transform_19, window_bounds = array<i64: 256, 128>}, {transform_indices = @transform_20, window_bounds = array<i64: 1, 8, 128>}]} {
    %c0 = arith.constant 0 : index
    %c0_0 = arith.constant 0 : index
    %c0_1 = arith.constant 0 : index
    %0 = vector.load %arg1[%c0, %c0_0, %c0_1] : memref<1x16x128xf32, #tpu.memory_space<vmem>>, vector<1x16x128xf32>
    %1 = vector.shape_cast %0 : vector<1x16x128xf32> to vector<16x128xf32>
    %c0_2 = arith.constant 0 : index
    %c0_3 = arith.constant 0 : index
    %c0_4 = arith.constant 0 : index
    %2 = vector.load %arg2[%c0_2, %c0_3, %c0_4] : memref<1x1x32xf32, #tpu.memory_space<vmem>>, vector<1x1x32xf32>
    %3 = vector.shape_cast %2 : vector<1x1x32xf32> to vector<1x32xf32>
    %4 = arith.truncf %1 : vector<16x128xf32> to vector<16x128xbf16>
    %cst = arith.constant 0.000000e+00 : bf16
    %5 = vector.broadcast %cst : bf16 to vector<1x128xbf16>
    %6 = vector.extract_strided_slice %4 {offsets = [0, 0], sizes = [15, 128], strides = [1, 1]} : vector<16x128xbf16> to vector<15x128xbf16>
    %7 = tpu.concatenate %5, %6 in 0 : vector<1x128xbf16>, vector<15x128xbf16> -> vector<16x128xbf16>
    %8 = vector.extract_strided_slice %4 {offsets = [1, 0], sizes = [15, 128], strides = [1, 1]} : vector<16x128xbf16> to vector<15x128xbf16>
    %9 = tpu.concatenate %8, %5 in 0 : vector<15x128xbf16>, vector<1x128xbf16> -> vector<16x128xbf16>
    %10 = tpu.concatenate %7, %4, %9 in 1 : vector<16x128xbf16>, vector<16x128xbf16>, vector<16x128xbf16> -> vector<16x384xbf16>
    %c0_5 = arith.constant 0 : index
    %c0_6 = arith.constant 0 : index
    %11 = vector.load %arg3[%c0_5, %c0_6] : memref<384x128xbf16, #tpu.memory_space<vmem>>, vector<384x128xbf16>
    %cst_7 = arith.constant dense<0.000000e+00> : vector<16x128xf32>
    %12 = tpu.matmul %10, %11, %cst_7 {dimension_numbers = #tpu.dot_dimension_numbers<[1], [0], [0], [1], [0, 0, 1, 1], [], []>} : vector<16x384xbf16>, vector<384x128xbf16>, vector<16x128xf32> -> vector<16x128xf32>
    %c0_8 = arith.constant 0 : index
    %c0_9 = arith.constant 0 : index
    %13 = vector.load %arg4[%c0_8, %c0_9] : memref<1x128xf32, #tpu.memory_space<vmem>>, vector<1x128xf32>
    %14 = vector.broadcast %13 : vector<1x128xf32> to vector<16x128xf32>
    %15 = arith.addf %12, %14 : vector<16x128xf32>
    %c0_10 = arith.constant 0 : index
    %c0_11 = arith.constant 0 : index
    %16 = vector.load %arg7[%c0_10, %c0_11] : memref<1x128xf32, #tpu.memory_space<vmem>>, vector<1x128xf32>
    %c0_12 = arith.constant 0 : index
    %c0_13 = arith.constant 0 : index
    %17 = vector.load %arg8[%c0_12, %c0_13] : memref<1x128xf32, #tpu.memory_space<vmem>>, vector<1x128xf32>
    %cst_14 = arith.constant dense<0.000000e+00> : vector<128xf32>
    %18 = vector.multi_reduction <add>, %15, %cst_14 [0] : vector<16x128xf32> to vector<128xf32>
    %19 = vector.shape_cast %18 : vector<128xf32> to vector<1x128xf32>
    %20 = arith.mulf %15, %15 : vector<16x128xf32>
    %cst_15 = arith.constant dense<0.000000e+00> : vector<128xf32>
    %21 = vector.multi_reduction <add>, %20, %cst_15 [0] : vector<16x128xf32> to vector<128xf32>
    %22 = vector.shape_cast %21 : vector<128xf32> to vector<1x128xf32>
    %23 = tpu.concatenate %19, %22 in 0 : vector<1x128xf32>, vector<1x128xf32> -> vector<2x128xf32>
    %c0_16 = arith.constant 0 : index
    %c0_17 = arith.constant 0 : index
    %24 = vector.load %arg17[%c0_16, %c0_17] : memref<128x2xf32, #tpu.memory_space<vmem>>, vector<128x2xf32>
    %cst_18 = arith.constant dense<0.000000e+00> : vector<2x2xf32>
    %25 = tpu.matmul %23, %24, %cst_18 {dimension_numbers = #tpu.dot_dimension_numbers<[1], [0], [0], [1], [0, 0, 1, 1], [], []>} : vector<2x128xf32>, vector<128x2xf32>, vector<2x2xf32> -> vector<2x2xf32>
    %cst_19 = arith.constant 9.765625E-4 : f32
    %26 = vector.broadcast %cst_19 : f32 to vector<2x2xf32>
    %27 = arith.mulf %25, %26 : vector<2x2xf32>
    %c0_20 = arith.constant 0 : index
    %c0_21 = arith.constant 0 : index
    %28 = vector.load %arg18[%c0_20, %c0_21] : memref<2x128xf32, #tpu.memory_space<vmem>>, vector<2x128xf32>
    %cst_22 = arith.constant dense<0.000000e+00> : vector<2x128xf32>
    %29 = tpu.matmul %27, %28, %cst_22 {dimension_numbers = #tpu.dot_dimension_numbers<[1], [0], [0], [1], [0, 0, 1, 1], [], []>} : vector<2x2xf32>, vector<2x128xf32>, vector<2x128xf32> -> vector<2x128xf32>
    %30 = vector.extract_strided_slice %29 {offsets = [0, 0], sizes = [1, 128], strides = [1, 1]} : vector<2x128xf32> to vector<1x128xf32>
    %31 = vector.extract_strided_slice %29 {offsets = [1, 0], sizes = [1, 128], strides = [1, 1]} : vector<2x128xf32> to vector<1x128xf32>
    %32 = arith.mulf %30, %30 : vector<1x128xf32>
    %33 = arith.subf %31, %32 : vector<1x128xf32>
    %34 = vector.broadcast %30 : vector<1x128xf32> to vector<16x128xf32>
    %35 = arith.subf %15, %34 : vector<16x128xf32>
    %cst_23 = arith.constant 9.99999974E-6 : f32
    %36 = vector.broadcast %cst_23 : f32 to vector<1x128xf32>
    %37 = arith.addf %33, %36 : vector<1x128xf32>
    %38 = math.rsqrt %37 : vector<1x128xf32>
    %39 = vector.broadcast %38 : vector<1x128xf32> to vector<16x128xf32>
    %40 = arith.mulf %35, %39 : vector<16x128xf32>
    %41 = vector.broadcast %16 : vector<1x128xf32> to vector<16x128xf32>
    %42 = arith.mulf %40, %41 : vector<16x128xf32>
    %43 = vector.broadcast %17 : vector<1x128xf32> to vector<16x128xf32>
    %44 = arith.addf %42, %43 : vector<16x128xf32>
    %c0_24 = arith.constant 0 : index
    %c0_25 = arith.constant 0 : index
    %45 = vector.load %arg5[%c0_24, %c0_25] : memref<32x256xf32, #tpu.memory_space<vmem>>, vector<32x256xf32>
    %cst_26 = arith.constant dense<0.000000e+00> : vector<1x256xf32>
    %46 = tpu.matmul %3, %45, %cst_26 {dimension_numbers = #tpu.dot_dimension_numbers<[1], [0], [0], [1], [0, 0, 1, 1], [], []>} : vector<1x32xf32>, vector<32x256xf32>, vector<1x256xf32> -> vector<1x256xf32>
    %c0_27 = arith.constant 0 : index
    %c0_28 = arith.constant 0 : index
    %47 = vector.load %arg6[%c0_27, %c0_28] : memref<1x256xf32, #tpu.memory_space<vmem>>, vector<1x256xf32>
    %48 = arith.addf %46, %47 : vector<1x256xf32>
    %49 = vector.extract_strided_slice %48 {offsets = [0, 0], sizes = [1, 128], strides = [1, 1]} : vector<1x256xf32> to vector<1x128xf32>
    %50 = vector.broadcast %49 : vector<1x128xf32> to vector<16x128xf32>
    %51 = arith.mulf %50, %44 : vector<16x128xf32>
    %52 = vector.extract_strided_slice %48 {offsets = [0, 128], sizes = [1, 128], strides = [1, 1]} : vector<1x256xf32> to vector<1x128xf32>
    %53 = vector.broadcast %52 : vector<1x128xf32> to vector<16x128xf32>
    %54 = arith.addf %51, %53 : vector<16x128xf32>
    %55 = arith.negf %54 : vector<16x128xf32>
    %56 = math.exp %55 : vector<16x128xf32>
    %cst_29 = arith.constant 1.000000e+00 : f32
    %57 = vector.broadcast %cst_29 : f32 to vector<16x128xf32>
    %58 = arith.addf %57, %56 : vector<16x128xf32>
    %59 = arith.divf %57, %58 : vector<16x128xf32>
    %60 = arith.mulf %54, %59 : vector<16x128xf32>
    %61 = arith.truncf %60 : vector<16x128xf32> to vector<16x128xbf16>
    %cst_30 = arith.constant 0.000000e+00 : bf16
    %62 = vector.broadcast %cst_30 : bf16 to vector<1x128xbf16>
    %63 = vector.extract_strided_slice %61 {offsets = [0, 0], sizes = [15, 128], strides = [1, 1]} : vector<16x128xbf16> to vector<15x128xbf16>
    %64 = tpu.concatenate %62, %63 in 0 : vector<1x128xbf16>, vector<15x128xbf16> -> vector<16x128xbf16>
    %65 = vector.extract_strided_slice %61 {offsets = [1, 0], sizes = [15, 128], strides = [1, 1]} : vector<16x128xbf16> to vector<15x128xbf16>
    %66 = tpu.concatenate %65, %62 in 0 : vector<15x128xbf16>, vector<1x128xbf16> -> vector<16x128xbf16>
    %67 = tpu.concatenate %64, %61, %66 in 1 : vector<16x128xbf16>, vector<16x128xbf16>, vector<16x128xbf16> -> vector<16x384xbf16>
    %c0_31 = arith.constant 0 : index
    %c0_32 = arith.constant 0 : index
    %68 = vector.load %arg9[%c0_31, %c0_32] : memref<384x128xbf16, #tpu.memory_space<vmem>>, vector<384x128xbf16>
    %cst_33 = arith.constant dense<0.000000e+00> : vector<16x128xf32>
    %69 = tpu.matmul %67, %68, %cst_33 {dimension_numbers = #tpu.dot_dimension_numbers<[1], [0], [0], [1], [0, 0, 1, 1], [], []>} : vector<16x384xbf16>, vector<384x128xbf16>, vector<16x128xf32> -> vector<16x128xf32>
    %c0_34 = arith.constant 0 : index
    %c0_35 = arith.constant 0 : index
    %70 = vector.load %arg10[%c0_34, %c0_35] : memref<1x128xf32, #tpu.memory_space<vmem>>, vector<1x128xf32>
    %71 = vector.broadcast %70 : vector<1x128xf32> to vector<16x128xf32>
    %72 = arith.addf %69, %71 : vector<16x128xf32>
    %c0_36 = arith.constant 0 : index
    %c0_37 = arith.constant 0 : index
    %73 = vector.load %arg13[%c0_36, %c0_37] : memref<1x128xf32, #tpu.memory_space<vmem>>, vector<1x128xf32>
    %c0_38 = arith.constant 0 : index
    %c0_39 = arith.constant 0 : index
    %74 = vector.load %arg14[%c0_38, %c0_39] : memref<1x128xf32, #tpu.memory_space<vmem>>, vector<1x128xf32>
    %cst_40 = arith.constant dense<0.000000e+00> : vector<128xf32>
    %75 = vector.multi_reduction <add>, %72, %cst_40 [0] : vector<16x128xf32> to vector<128xf32>
    %76 = vector.shape_cast %75 : vector<128xf32> to vector<1x128xf32>
    %77 = arith.mulf %72, %72 : vector<16x128xf32>
    %cst_41 = arith.constant dense<0.000000e+00> : vector<128xf32>
    %78 = vector.multi_reduction <add>, %77, %cst_41 [0] : vector<16x128xf32> to vector<128xf32>
    %79 = vector.shape_cast %78 : vector<128xf32> to vector<1x128xf32>
    %80 = tpu.concatenate %76, %79 in 0 : vector<1x128xf32>, vector<1x128xf32> -> vector<2x128xf32>
    %c0_42 = arith.constant 0 : index
    %c0_43 = arith.constant 0 : index
    %81 = vector.load %arg17[%c0_42, %c0_43] : memref<128x2xf32, #tpu.memory_space<vmem>>, vector<128x2xf32>
    %cst_44 = arith.constant dense<0.000000e+00> : vector<2x2xf32>
    %82 = tpu.matmul %80, %81, %cst_44 {dimension_numbers = #tpu.dot_dimension_numbers<[1], [0], [0], [1], [0, 0, 1, 1], [], []>} : vector<2x128xf32>, vector<128x2xf32>, vector<2x2xf32> -> vector<2x2xf32>
    %cst_45 = arith.constant 9.765625E-4 : f32
    %83 = vector.broadcast %cst_45 : f32 to vector<2x2xf32>
    %84 = arith.mulf %82, %83 : vector<2x2xf32>
    %c0_46 = arith.constant 0 : index
    %c0_47 = arith.constant 0 : index
    %85 = vector.load %arg18[%c0_46, %c0_47] : memref<2x128xf32, #tpu.memory_space<vmem>>, vector<2x128xf32>
    %cst_48 = arith.constant dense<0.000000e+00> : vector<2x128xf32>
    %86 = tpu.matmul %84, %85, %cst_48 {dimension_numbers = #tpu.dot_dimension_numbers<[1], [0], [0], [1], [0, 0, 1, 1], [], []>} : vector<2x2xf32>, vector<2x128xf32>, vector<2x128xf32> -> vector<2x128xf32>
    %87 = vector.extract_strided_slice %86 {offsets = [0, 0], sizes = [1, 128], strides = [1, 1]} : vector<2x128xf32> to vector<1x128xf32>
    %88 = vector.extract_strided_slice %86 {offsets = [1, 0], sizes = [1, 128], strides = [1, 1]} : vector<2x128xf32> to vector<1x128xf32>
    %89 = arith.mulf %87, %87 : vector<1x128xf32>
    %90 = arith.subf %88, %89 : vector<1x128xf32>
    %91 = vector.broadcast %87 : vector<1x128xf32> to vector<16x128xf32>
    %92 = arith.subf %72, %91 : vector<16x128xf32>
    %cst_49 = arith.constant 9.99999974E-6 : f32
    %93 = vector.broadcast %cst_49 : f32 to vector<1x128xf32>
    %94 = arith.addf %90, %93 : vector<1x128xf32>
    %95 = math.rsqrt %94 : vector<1x128xf32>
    %96 = vector.broadcast %95 : vector<1x128xf32> to vector<16x128xf32>
    %97 = arith.mulf %92, %96 : vector<16x128xf32>
    %98 = vector.broadcast %73 : vector<1x128xf32> to vector<16x128xf32>
    %99 = arith.mulf %97, %98 : vector<16x128xf32>
    %100 = vector.broadcast %74 : vector<1x128xf32> to vector<16x128xf32>
    %101 = arith.addf %99, %100 : vector<16x128xf32>
    %c0_50 = arith.constant 0 : index
    %c0_51 = arith.constant 0 : index
    %102 = vector.load %arg11[%c0_50, %c0_51] : memref<32x256xf32, #tpu.memory_space<vmem>>, vector<32x256xf32>
    %cst_52 = arith.constant dense<0.000000e+00> : vector<1x256xf32>
    %103 = tpu.matmul %3, %102, %cst_52 {dimension_numbers = #tpu.dot_dimension_numbers<[1], [0], [0], [1], [0, 0, 1, 1], [], []>} : vector<1x32xf32>, vector<32x256xf32>, vector<1x256xf32> -> vector<1x256xf32>
    %c0_53 = arith.constant 0 : index
    %c0_54 = arith.constant 0 : index
    %104 = vector.load %arg12[%c0_53, %c0_54] : memref<1x256xf32, #tpu.memory_space<vmem>>, vector<1x256xf32>
    %105 = arith.addf %103, %104 : vector<1x256xf32>
    %106 = vector.extract_strided_slice %105 {offsets = [0, 0], sizes = [1, 128], strides = [1, 1]} : vector<1x256xf32> to vector<1x128xf32>
    %107 = vector.broadcast %106 : vector<1x128xf32> to vector<16x128xf32>
    %108 = arith.mulf %107, %101 : vector<16x128xf32>
    %109 = vector.extract_strided_slice %105 {offsets = [0, 128], sizes = [1, 128], strides = [1, 1]} : vector<1x256xf32> to vector<1x128xf32>
    %110 = vector.broadcast %109 : vector<1x128xf32> to vector<16x128xf32>
    %111 = arith.addf %108, %110 : vector<16x128xf32>
    %112 = arith.negf %111 : vector<16x128xf32>
    %113 = math.exp %112 : vector<16x128xf32>
    %cst_55 = arith.constant 1.000000e+00 : f32
    %114 = vector.broadcast %cst_55 : f32 to vector<16x128xf32>
    %115 = arith.addf %114, %113 : vector<16x128xf32>
    %116 = arith.divf %114, %115 : vector<16x128xf32>
    %117 = arith.mulf %111, %116 : vector<16x128xf32>
    %118 = arith.addf %1, %117 : vector<16x128xf32>
    %119 = arith.truncf %118 : vector<16x128xf32> to vector<16x128xbf16>
    %cst_56 = arith.constant 0.000000e+00 : bf16
    %120 = vector.broadcast %cst_56 : bf16 to vector<1x128xbf16>
    %121 = vector.extract_strided_slice %119 {offsets = [0, 0], sizes = [15, 128], strides = [1, 1]} : vector<16x128xbf16> to vector<15x128xbf16>
    %122 = tpu.concatenate %120, %121 in 0 : vector<1x128xbf16>, vector<15x128xbf16> -> vector<16x128xbf16>
    %123 = vector.extract_strided_slice %119 {offsets = [1, 0], sizes = [15, 128], strides = [1, 1]} : vector<16x128xbf16> to vector<15x128xbf16>
    %124 = tpu.concatenate %123, %120 in 0 : vector<15x128xbf16>, vector<1x128xbf16> -> vector<16x128xbf16>
    %125 = tpu.concatenate %122, %119, %124 in 1 : vector<16x128xbf16>, vector<16x128xbf16>, vector<16x128xbf16> -> vector<16x384xbf16>
    %c0_57 = arith.constant 0 : index
    %c0_58 = arith.constant 0 : index
    %126 = vector.load %arg15[%c0_57, %c0_58] : memref<384x256xbf16, #tpu.memory_space<vmem>>, vector<384x256xbf16>
    %cst_59 = arith.constant dense<0.000000e+00> : vector<16x256xf32>
    %127 = tpu.matmul %125, %126, %cst_59 {dimension_numbers = #tpu.dot_dimension_numbers<[1], [0], [0], [1], [0, 0, 1, 1], [], []>} : vector<16x384xbf16>, vector<384x256xbf16>, vector<16x256xf32> -> vector<16x256xf32>
    %c0_60 = arith.constant 0 : index
    %c0_61 = arith.constant 0 : index
    %128 = vector.load %arg16[%c0_60, %c0_61] : memref<1x256xf32, #tpu.memory_space<vmem>>, vector<1x256xf32>
    %129 = vector.broadcast %128 : vector<1x256xf32> to vector<16x256xf32>
    %130 = arith.addf %127, %129 : vector<16x256xf32>
    %c0_62 = arith.constant 0 : index
    %c0_63 = arith.constant 0 : index
    %131 = vector.load %arg19[%c0_62, %c0_63] : memref<8x16xf32, #tpu.memory_space<vmem>>, vector<8x16xf32>
    %cst_64 = arith.constant dense<0.000000e+00> : vector<8x256xf32>
    %132 = tpu.matmul %131, %130, %cst_64 {dimension_numbers = #tpu.dot_dimension_numbers<[1], [0], [0], [1], [0, 0, 1, 1], [], []>} : vector<8x16xf32>, vector<16x256xf32>, vector<8x256xf32> -> vector<8x256xf32>
    %c0_65 = arith.constant 0 : index
    %c0_66 = arith.constant 0 : index
    %133 = vector.load %arg20[%c0_65, %c0_66] : memref<256x128xf32, #tpu.memory_space<vmem>>, vector<256x128xf32>
    %cst_67 = arith.constant dense<0.000000e+00> : vector<8x128xf32>
    %134 = tpu.matmul %132, %133, %cst_67 {dimension_numbers = #tpu.dot_dimension_numbers<[1], [0], [0], [1], [0, 0, 1, 1], [], []>} : vector<8x256xf32>, vector<256x128xf32>, vector<8x128xf32> -> vector<8x128xf32>
    %cst_68 = arith.constant 0.111111112 : f32
    %135 = vector.broadcast %cst_68 : f32 to vector<8x128xf32>
    %136 = arith.mulf %134, %135 : vector<8x128xf32>
    %137 = arith.negf %136 : vector<8x128xf32>
    %138 = math.exp %137 : vector<8x128xf32>
    %cst_69 = arith.constant 1.000000e+00 : f32
    %139 = vector.broadcast %cst_69 : f32 to vector<8x128xf32>
    %140 = arith.addf %139, %138 : vector<8x128xf32>
    %141 = arith.divf %139, %140 : vector<8x128xf32>
    %142 = arith.mulf %136, %141 : vector<8x128xf32>
    %c0_70 = arith.constant 0 : index
    %c0_71 = arith.constant 0 : index
    %c0_72 = arith.constant 0 : index
    %143 = vector.load %arg21[%c0_70, %c0_71, %c0_72] : memref<1x8x128xf32, #tpu.memory_space<vmem>>, vector<1x8x128xf32>
    %144 = vector.shape_cast %143 : vector<1x8x128xf32> to vector<8x128xf32>
    %145 = vector.shape_cast %142 : vector<8x128xf32> to vector<1x8x128xf32>
    tpu.vector_store %arg21[%c0_70, %c0_71, %c0_72], %145 {strides = array<i32>} : memref<1x8x128xf32, #tpu.memory_space<vmem>>, vector<1x8x128xf32>,
    return
  }
  func.func @transform_0(%arg0: i32) -> (i32, i32, i32) {
    %c0_i32 = arith.constant 0 : i32
    %c0_i32_0 = arith.constant 0 : i32
    %c0_i32_1 = arith.constant 0 : i32
    return %arg0, %c0_i32, %c0_i32_0 : i32, i32, i32
  }
  func.func @transform_1(%arg0: i32) -> (i32, i32, i32) {
    %c0_i32 = arith.constant 0 : i32
    %c0_i32_0 = arith.constant 0 : i32
    %c0_i32_1 = arith.constant 0 : i32
    return %arg0, %c0_i32, %c0_i32_0 : i32, i32, i32
  }
  func.func @transform_2(%arg0: i32) -> (i32, i32) {
    %c0_i32 = arith.constant 0 : i32
    %c0_i32_0 = arith.constant 0 : i32
    %c0_i32_1 = arith.constant 0 : i32
    return %c0_i32, %c0_i32_0 : i32, i32
  }
  func.func @transform_3(%arg0: i32) -> (i32, i32) {
    %c0_i32 = arith.constant 0 : i32
    %c0_i32_0 = arith.constant 0 : i32
    %c0_i32_1 = arith.constant 0 : i32
    return %c0_i32, %c0_i32_0 : i32, i32
  }
  func.func @transform_4(%arg0: i32) -> (i32, i32) {
    %c0_i32 = arith.constant 0 : i32
    %c0_i32_0 = arith.constant 0 : i32
    %c0_i32_1 = arith.constant 0 : i32
    return %c0_i32, %c0_i32_0 : i32, i32
  }
  func.func @transform_5(%arg0: i32) -> (i32, i32) {
    %c0_i32 = arith.constant 0 : i32
    %c0_i32_0 = arith.constant 0 : i32
    %c0_i32_1 = arith.constant 0 : i32
    return %c0_i32, %c0_i32_0 : i32, i32
  }
  func.func @transform_6(%arg0: i32) -> (i32, i32) {
    %c0_i32 = arith.constant 0 : i32
    %c0_i32_0 = arith.constant 0 : i32
    %c0_i32_1 = arith.constant 0 : i32
    return %c0_i32, %c0_i32_0 : i32, i32
  }
  func.func @transform_7(%arg0: i32) -> (i32, i32) {
    %c0_i32 = arith.constant 0 : i32
    %c0_i32_0 = arith.constant 0 : i32
    %c0_i32_1 = arith.constant 0 : i32
    return %c0_i32, %c0_i32_0 : i32, i32
  }
  func.func @transform_8(%arg0: i32) -> (i32, i32) {
    %c0_i32 = arith.constant 0 : i32
    %c0_i32_0 = arith.constant 0 : i32
    %c0_i32_1 = arith.constant 0 : i32
    return %c0_i32, %c0_i32_0 : i32, i32
  }
  func.func @transform_9(%arg0: i32) -> (i32, i32) {
    %c0_i32 = arith.constant 0 : i32
    %c0_i32_0 = arith.constant 0 : i32
    %c0_i32_1 = arith.constant 0 : i32
    return %c0_i32, %c0_i32_0 : i32, i32
  }
  func.func @transform_10(%arg0: i32) -> (i32, i32) {
    %c0_i32 = arith.constant 0 : i32
    %c0_i32_0 = arith.constant 0 : i32
    %c0_i32_1 = arith.constant 0 : i32
    return %c0_i32, %c0_i32_0 : i32, i32
  }
  func.func @transform_11(%arg0: i32) -> (i32, i32) {
    %c0_i32 = arith.constant 0 : i32
    %c0_i32_0 = arith.constant 0 : i32
    %c0_i32_1 = arith.constant 0 : i32
    return %c0_i32, %c0_i32_0 : i32, i32
  }
  func.func @transform_12(%arg0: i32) -> (i32, i32) {
    %c0_i32 = arith.constant 0 : i32
    %c0_i32_0 = arith.constant 0 : i32
    %c0_i32_1 = arith.constant 0 : i32
    return %c0_i32, %c0_i32_0 : i32, i32
  }
  func.func @transform_13(%arg0: i32) -> (i32, i32) {
    %c0_i32 = arith.constant 0 : i32
    %c0_i32_0 = arith.constant 0 : i32
    %c0_i32_1 = arith.constant 0 : i32
    return %c0_i32, %c0_i32_0 : i32, i32
  }
  func.func @transform_14(%arg0: i32) -> (i32, i32) {
    %c0_i32 = arith.constant 0 : i32
    %c0_i32_0 = arith.constant 0 : i32
    %c0_i32_1 = arith.constant 0 : i32
    return %c0_i32, %c0_i32_0 : i32, i32
  }
  func.func @transform_15(%arg0: i32) -> (i32, i32) {
    %c0_i32 = arith.constant 0 : i32
    %c0_i32_0 = arith.constant 0 : i32
    %c0_i32_1 = arith.constant 0 : i32
    return %c0_i32, %c0_i32_0 : i32, i32
  }
  func.func @transform_16(%arg0: i32) -> (i32, i32) {
    %c0_i32 = arith.constant 0 : i32
    %c0_i32_0 = arith.constant 0 : i32
    %c0_i32_1 = arith.constant 0 : i32
    return %c0_i32, %c0_i32_0 : i32, i32
  }
  func.func @transform_17(%arg0: i32) -> (i32, i32) {
    %c0_i32 = arith.constant 0 : i32
    %c0_i32_0 = arith.constant 0 : i32
    %c0_i32_1 = arith.constant 0 : i32
    return %c0_i32, %c0_i32_0 : i32, i32
  }
  func.func @transform_18(%arg0: i32) -> (i32, i32) {
    %c0_i32 = arith.constant 0 : i32
    %c0_i32_0 = arith.constant 0 : i32
    %c0_i32_1 = arith.constant 0 : i32
    return %c0_i32, %c0_i32_0 : i32, i32
  }
  func.func @transform_19(%arg0: i32) -> (i32, i32) {
    %c0_i32 = arith.constant 0 : i32
    %c0_i32_0 = arith.constant 0 : i32
    %c0_i32_1 = arith.constant 0 : i32
    return %c0_i32, %c0_i32_0 : i32, i32
  }
  func.func @transform_20(%arg0: i32) -> (i32, i32, i32) {
    %c0_i32 = arith.constant 0 : i32
    %c0_i32_0 = arith.constant 0 : i32
    %c0_i32_1 = arith.constant 0 : i32
    return %arg0, %c0_i32, %c0_i32_0 : i32, i32, i32
  }
}

</mosaic_0001>

<llo_original>
// kernel: tile.103
$region0: #{tile.103}
  #allocation0 [shape = 's32[1]{0}', space=sflag, size = 0x4, scoped, tag = 'scoped memory for tile.103']
  %s0 = inlined_call_operand.vmem [shape: f32[8], index: 0, kind: input, shape index: {}]
  %s1 = inlined_call_operand.vmem [shape: f32[16,8], index: 1, kind: output, shape index: {}]
  // Predicated region
  $region2: #{tile.103} parent=0 // pred_check
    _
  $region3: #{tile.103} parent=0 // pred_check_branch
    %3 = sbr.rel (0) target = $region5
  $region4: #{tile.103} parent=0 // pred_region
    _
  $region5: #{tile.103} parent=0 // pred_fallthru
    _
  %v4 = vld [vmem:[%s0] ss:$0 sm:$0xff]
  %5 = vst [vmem:[%s1] sm:$0xff] %v4
  %s6 = scalar_lea.vmem %s1, 8
  %7 = vst [vmem:[%s6] sm:$0xff] %v4

// kernel: tile.104
$region0: #{tile.104}
  %s0 = inlined_call_operand.vmem [shape: f32[16,8], index: 0, kind: input, shape index: {}]
  %s1 = inlined_call_operand.vmem [shape: f32[1,128], index: 1, kind: output, shape index: {}]
  $region1: #{tile.104} parent=0
    #allocation0 [shape = 'u8[4096]{0}', space=vmem, size = 0x1000, scoped, tag = 'scoped mem for output reshape']
    %v2 = vld [vmem:[%s0] sm:$0x1]
    %vm3 = vcmask 64512
    %4 = vst.msk [vmem:[#allocation0] sm:$0x1] %vm3, %v2
    %s5 = scalar_lea.vmem %s0, 15
    %v6 = vld [vmem:[%s5] sm:$0x1]
    %7 = vrot.lane.b32.xlu0 %v6, 120
    %v8 = vpop.permute.xlu0 %7
    %vm9 = vcmask 1048512
    %10 = vst.msk [vmem:[#allocation0] sm:$0x1] %vm9, %v8
    %s11 = scalar_lea.vmem %s0, 14
    %v12 = vld [vmem:[%s11] sm:$0x1]
    %13 = vrot.lane.b32.xlu0 %v12, 112
    %v14 = vpop.permute.xlu0 %13
    %vm15 = vcmask 982912
    %16 = vst.msk [vmem:[#allocation0] sm:$0x1] %vm15, %v14
    %s17 = scalar_lea.vmem %s0, 13
    %v18 = vld [vmem:[%s17] sm:$0x1]
    %19 = vrot.lane.b32.xlu0 %v18, 104
    %v20 = vpop.permute.xlu0 %19
    %vm21 = vcmask 917312
    %22 = vst.msk [vmem:[#allocation0] sm:$0x1] %vm21, %v20
    %s23 = scalar_lea.vmem %s0, 12
    %v24 = vld [vmem:[%s23] sm:$0x1]
    %25 = vrot.lane.b32.xlu0 %v24, 96
    %v26 = vpop.permute.xlu0 %25
    %vm27 = vcmask 851712
    %28 = vst.msk [vmem:[#allocation0] sm:$0x1] %vm27, %v26
    %s29 = scalar_lea.vmem %s0, 11
    %v30 = vld [vmem:[%s29] sm:$0x1]
    %31 = vrot.lane.b32.xlu0 %v30, 88
    %v32 = vpop.permute.xlu0 %31
    %vm33 = vcmask 786112
    %34 = vst.msk [vmem:[#allocation0] sm:$0x1] %vm33, %v32
    %s35 = scalar_lea.vmem %s0, 10
    %v36 = vld [vmem:[%s35] sm:$0x1]
    %37 = vrot.lane.b32.xlu0 %v36, 80
    %v38 = vpop.permute.xlu0 %37
    %vm39 = vcmask 720512
    %40 = vst.msk [vmem:[#allocation0] sm:$0x1] %vm39, %v38
    %s41 = scalar_lea.vmem %s0, 9
    %v42 = vld [vmem:[%s41] sm:$0x1]
    %43 = vrot.lane.b32.xlu0 %v42, 72
    %v44 = vpop.permute.xlu0 %43
    %vm45 = vcmask 654912
    %46 = vst.msk [vmem:[#allocation0] sm:$0x1] %vm45, %v44
    %s47 = scalar_lea.vmem %s0, 8
    %v48 = vld [vmem:[%s47] sm:$0x1]
    %49 = vrot.lane.b32.xlu0 %v48, 64
    %v50 = vpop.permute.xlu0 %49
    %vm51 = vcmask 589312
    %52 = vst.msk [vmem:[#allocation0] sm:$0x1] %vm51, %v50
    %s53 = scalar_lea.vmem %s0, 7
    %v54 = vld [vmem:[%s53] sm:$0x1]
    %55 = vrot.lane.b32.xlu0 %v54, 56
    %v56 = vpop.permute.xlu0 %55
    %vm57 = vcmask 523712
    %58 = vst.msk [vmem:[#allocation0] sm:$0x1] %vm57, %v56
    %s59 = scalar_lea.vmem %s0, 6
    %v60 = vld [vmem:[%s59] sm:$0x1]
    %61 = vrot.lane.b32.xlu0 %v60, 48
    %v62 = vpop.permute.xlu0 %61
    %vm63 = vcmask 458112
    %64 = vst.msk [vmem:[#allocation0] sm:$0x1] %vm63, %v62
    %s65 = scalar_lea.vmem %s0, 5
    %v66 = vld [vmem:[%s65] sm:$0x1]
    %67 = vrot.lane.b32.xlu0 %v66, 40
    %v68 = vpop.permute.xlu0 %67
    %vm69 = vcmask 392512
    %70 = vst.msk [vmem:[#allocation0] sm:$0x1] %vm69, %v68
    %s71 = scalar_lea.vmem %s0, 4
    %v72 = vld [vmem:[%s71] sm:$0x1]
    %73 = vrot.lane.b32.xlu0 %v72, 32
    %v74 = vpop.permute.xlu0 %73
    %vm75 = vcmask 326912
    %76 = vst.msk [vmem:[#allocation0] sm:$0x1] %vm75, %v74
    %s77 = scalar_lea.vmem %s0, 3
    %v78 = vld [vmem:[%s77] sm:$0x1]
    %79 = vrot.lane.b32.xlu0 %v78, 24
    %v80 = vpop.permute.xlu0 %79
    %vm81 = vcmask 261312
    %82 = vst.msk [vmem:[#allocation0] sm:$0x1] %vm81, %v80
    %s83 = scalar_lea.vmem %s0, 2
    %v84 = vld [vmem:[%s83] sm:$0x1]
    %85 = vrot.lane.b32.xlu0 %v84, 16
    %v86 = vpop.permute.xlu0 %85
    %vm87 = vcmask 195712
    %88 = vst.msk [vmem:[#allocation0] sm:$0x1] %vm87, %v86
    %s89 = scalar_lea.vmem %s0, 1
    %v90 = vld [vmem:[%s89] sm:$0x1]
    %91 = vrot.lane.b32.xlu0 %v90, 8
    %v92 = vpop.permute.xlu0 %91
    %vm93 = vcmask 130112
    %94 = vst.msk [vmem:[#allocation0] sm:$0x1] %vm93, %v92
    %s96 = sshllo.u32 0, 1
    %v98 = vld [vmem:[#allocation0] sm:%s96]
    %s99 = sshllo.u32 0, 1
    %100 = vst [vmem:[%s1] sm:%s99] %v98

// kernel: tile.88
$region0: #{tile.88}
  #allocation0 [shape = 's32[1]{0}', space=sflag, size = 0x4, scoped, tag = 'scoped memory for tile.88']
  %s0 = inlined_call_operand.vmem [shape: f32[16], index: 0, kind: input, shape index: {}]
  %s1 = inlined_call_operand.vmem [shape: f32[16,16], index: 1, kind: output, shape index: {}]
  // Predicated region
  $region2: #{tile.88} parent=0 // pred_check
    _
  $region3: #{tile.88} parent=0 // pred_check_branch
    %3 = sbr.rel (0) target = $region5
  $region4: #{tile.88} parent=0 // pred_region
    _
  $region5: #{tile.88} parent=0 // pred_fallthru
    _
  %v4 = vld [vmem:[%s0] ss:$0 sm:$0xff]
  %5 = vst [vmem:[%s1] sm:$0xff] %v4
  %s6 = scalar_lea.vmem %s1, 8
  %7 = vst [vmem:[%s6] sm:$0xff] %v4

// kernel: tile.89
$region0: #{tile.89}
  %s0 = inlined_call_operand.vmem [shape: f32[16,16], index: 0, kind: input, shape index: {}]
  %s1 = inlined_call_operand.vmem [shape: f32[1,256], index: 1, kind: output, shape index: {}]
  $region1: #{tile.89} parent=0
    #allocation0 [shape = 'u8[8192]{0}', space=vmem, size = 0x2000, scoped, tag = 'scoped mem for output reshape']
    %s2 = smov 3
    %v3 = vld [vmem:[%s0] ss:$8 sm:%s2]
    %vm4 = vcmask 130048
    %5 = vst.msk [vmem:[#allocation0] ss:$8 sm:$0x3] %vm4, %v3
    %s6 = scalar_lea.vmem %s0, 7
    %s7 = smov 3
    %v8 = vld [vmem:[%s6] ss:$8 sm:%s7]
    %9 = vrot.lane.b32.xlu0 %v8, 112
    %v10 = vpop.permute.xlu0 %9
    %vm11 = vcmask 1048448
    %12 = vst.msk [vmem:[#allocation0] ss:$8 sm:$0x3] %vm11, %v10
    %s13 = scalar_lea.vmem %s0, 6
    %s14 = smov 3
    %v15 = vld [vmem:[%s13] ss:$8 sm:%s14]
    %16 = vrot.lane.b32.xlu0 %v15, 96
    %v17 = vpop.permute.xlu0 %16
    %vm18 = vcmask 917248
    %19 = vst.msk [vmem:[#allocation0] ss:$8 sm:$0x3] %vm18, %v17
    %s20 = scalar_lea.vmem %s0, 5
    %s21 = smov 3
    %v22 = vld [vmem:[%s20] ss:$8 sm:%s21]
    %23 = vrot.lane.b32.xlu0 %v22, 80
    %v24 = vpop.permute.xlu0 %23
    %vm25 = vcmask 786048
    %26 = vst.msk [vmem:[#allocation0] ss:$8 sm:$0x3] %vm25, %v24
    %s27 = scalar_lea.vmem %s0, 4
    %s28 = smov 3
    %v29 = vld [vmem:[%s27] ss:$8 sm:%s28]
    %30 = vrot.lane.b32.xlu0 %v29, 64
    %v31 = vpop.permute.xlu0 %30
    %vm32 = vcmask 654848
    %33 = vst.msk [vmem:[#allocation0] ss:$8 sm:$0x3] %vm32, %v31
    %s34 = scalar_lea.vmem %s0, 3
    %s35 = smov 3
    %v36 = vld [vmem:[%s34] ss:$8 sm:%s35]
    %37 = vrot.lane.b32.xlu0 %v36, 48
    %v38 = vpop.permute.xlu0 %37
    %vm39 = vcmask 523648
    %40 = vst.msk [vmem:[#allocation0] ss:$8 sm:$0x3] %vm39, %v38
    %s41 = scalar_lea.vmem %s0, 2
    %s42 = smov 3
    %v43 = vld [vmem:[%s41] ss:$8 sm:%s42]
    %44 = vrot.lane.b32.xlu0 %v43, 32
    %v45 = vpop.permute.xlu0 %44
    %vm46 = vcmask 392448
    %47 = vst.msk [vmem:[#allocation0] ss:$8 sm:$0x3] %vm46, %v45
    %s48 = scalar_lea.vmem %s0, 1
    %s49 = smov 3
    %v50 = vld [vmem:[%s48] ss:$8 sm:%s49]
    %51 = vrot.lane.b32.xlu0 %v50, 16
    %v52 = vpop.permute.xlu0 %51
    %vm53 = vcmask 261248
    %54 = vst.msk [vmem:[#allocation0] ss:$8 sm:$0x3] %vm53, %v52
    %s56 = sshllo.u32 0, 1
    %v58 = vld [vmem:[#allocation0] sm:%s56]
    %s59 = sshllo.u32 0, 1
    %60 = vst [vmem:[%s1] sm:%s59] %v58
    %s61 = scalar_lea.vmem [#allocation0], 8
    %v62 = vld [vmem:[%s61] sm:%s56]
    %s63 = sshllo.u32 0, 1
    %s64 = scalar_lea.vmem %s1, 1
    %65 = vst [vmem:[%s64] sm:%s63] %v62

// kernel: cond_res_block.1
$region0: #{cond_res_block.1}
  #allocation0 [shape = 'u32[]', space=smem, size = 0x4, offset = 0x4, fixed_abs, tag = 'smem constant byte address 0x4 - core index']
  #allocation1 [shape = 'u32[144,128]{1,0:T(1,128)}', space=vmem, size = 0x12000, scoped, tag = 'internal scratch']
  %s0 = inlined_call_operand.vmem [shape: f32[2,16,128], index: 0, kind: input, shape index: {}]
  %s1 = inlined_call_operand.vmem [shape: f32[2,1,32], index: 1, kind: input, shape index: {}]
  %s2 = inlined_call_operand.vmem [shape: bf16[384,128], index: 2, kind: input, shape index: {}]
  %s3 = inlined_call_operand.vmem [shape: f32[1,128], index: 3, kind: input, shape index: {}]
  %s4 = inlined_call_operand.vmem [shape: f32[32,256], index: 4, kind: input, shape index: {}]
  %s5 = inlined_call_operand.vmem [shape: f32[1,256], index: 5, kind: input, shape index: {}]
  %s6 = inlined_call_operand.vmem [shape: f32[1,128], index: 6, kind: input, shape index: {}]
  %s7 = inlined_call_operand.vmem [shape: f32[1,128], index: 7, kind: input, shape index: {}]
  %s8 = inlined_call_operand.vmem [shape: bf16[384,128], index: 8, kind: input, shape index: {}]
  %s9 = inlined_call_operand.vmem [shape: f32[1,128], index: 9, kind: input, shape index: {}]
  %s10 = inlined_call_operand.vmem [shape: f32[32,256], index: 10, kind: input, shape index: {}]
  %s11 = inlined_call_operand.vmem [shape: f32[1,256], index: 11, kind: input, shape index: {}]
  %s12 = inlined_call_operand.vmem [shape: f32[1,128], index: 12, kind: input, shape index: {}]
  %s13 = inlined_call_operand.vmem [shape: f32[1,128], index: 13, kind: input, shape index: {}]
  %s14 = inlined_call_operand.vmem [shape: bf16[384,256], index: 14, kind: input, shape index: {}]
  %s15 = inlined_call_operand.vmem [shape: f32[1,256], index: 15, kind: input, shape index: {}]
  %s16 = inlined_call_operand.vmem [shape: f32[128,2], index: 16, kind: input, shape index: {}]
  %s17 = inlined_call_operand.vmem [shape: f32[2,128], index: 17, kind: input, shape index: {}]
  %s18 = inlined_call_operand.vmem [shape: f32[8,16], index: 18, kind: input, shape index: {}]
  %s19 = inlined_call_operand.vmem [shape: f32[256,128], index: 19, kind: input, shape index: {}]
  %s20 = inlined_call_operand.vmem [shape: f32[2,8,128], index: 20, kind: output, shape index: {}]
  %s21 = sld [smem:[#allocation0]]
  $region113: #{cond_res_block.1} parent=0
    _
  %s23 = ssub.s32 1, %s21
  %s24 = scalar_select 0, %s23, %s21
  loop: start=0, step=1, limit=4
  $region2: #{cond_res_block.1} parent=0 // loop_pre_header
    _
  $region3: #{cond_res_block.1} parent=0 // loop_header
    %s26 = sphi 0, %s30
    %p27 = scmp.ge.s32.totalorder %s26, 4
    %s36 = sphi 0, %s38
    %s39 = sphi 0, %s36
    %s40 = sphi 0, %s39
    %s56 = sphi 0, %s40
    %s62 = sphi 0, %s64
    %s65 = sphi 0, %s62
    %s66 = sphi 0, %s65
    %s82 = sphi 0, %s66
    %s86 = sphi 0, %s86
    %s88 = sphi 0, %s86
    %s89 = sphi 0, %s88
    %s103 = sphi 0, %s89
    %s107 = sphi 0, %s107
    %s109 = sphi 0, %s107
    %s110 = sphi 0, %s109
    %s124 = sphi 0, %s110
    %s128 = sphi 0, %s128
    %s130 = sphi 0, %s128
    %s131 = sphi 0, %s130
    %s145 = sphi 0, %s131
    %s149 = sphi 0, %s149
    %s151 = sphi 0, %s149
    %s152 = sphi 0, %s151
    %s166 = sphi 0, %s152
    %s170 = sphi 0, %s170
    %s172 = sphi 0, %s170
    %s173 = sphi 0, %s172
    %s187 = sphi 0, %s173
    %s191 = sphi 0, %s191
    %s193 = sphi 0, %s191
    %s194 = sphi 0, %s193
    %s208 = sphi 0, %s194
    %s212 = sphi 0, %s212
    %s214 = sphi 0, %s212
    %s215 = sphi 0, %s214
    %s229 = sphi 0, %s215
    %s233 = sphi 0, %s233
    %s235 = sphi 0, %s233
    %s236 = sphi 0, %s235
    %s250 = sphi 0, %s236
    %s254 = sphi 0, %s254
    %s256 = sphi 0, %s254
    %s257 = sphi 0, %s256
    %s271 = sphi 0, %s257
    %s275 = sphi 0, %s275
    %s277 = sphi 0, %s275
    %s278 = sphi 0, %s277
    %s292 = sphi 0, %s278
    %s296 = sphi 0, %s296
    %s298 = sphi 0, %s296
    %s299 = sphi 0, %s298
    %s313 = sphi 0, %s299
    %s317 = sphi 0, %s317
    %s319 = sphi 0, %s317
    %s320 = sphi 0, %s319
    %s334 = sphi 0, %s320
    %s338 = sphi 0, %s338
    %s340 = sphi 0, %s338
    %s341 = sphi 0, %s340
    %s355 = sphi 0, %s341
    %s359 = sphi 0, %s359
    %s361 = sphi 0, %s359
    %s362 = sphi 0, %s361
    %s376 = sphi 0, %s362
    %s380 = sphi 0, %s380
    %s382 = sphi 0, %s380
    %s383 = sphi 0, %s382
    %s397 = sphi 0, %s383
    %s401 = sphi 0, %s401
    %s403 = sphi 0, %s401
    %s404 = sphi 0, %s403
    %s418 = sphi 0, %s404
    %s422 = sphi 0, %s422
    %s424 = sphi 0, %s422
    %s425 = sphi 0, %s424
    %s439 = sphi 0, %s425
    %s443 = sphi 0, %s443
    %s445 = sphi 0, %s443
    %s446 = sphi 0, %s445
    %s460 = sphi 0, %s446
    %s466 = sphi 0, %s468
    %s469 = sphi 0, %s466
    %s470 = sphi 0, %s469
    %s486 = sphi 0, %s470
  $region4: #{cond_res_block.1} parent=0 // loop_header_branch
    %29 = sbr.rel (%p27) target = $region8
  $region5: #{cond_res_block.1} parent=0 // loop_body
    %s31 = ssub.s32 %s26, 1
    %s32 = ssub.s32 %s26, 2
    %s33 = sadd.s32 %s26, 1
    %s34 = ssub.s32 %s26, %s33
    %p35 = scmp.eq.s32.totalorder %s34, 0
    %s37 = sadd.s32 %s36, 1
    %s38 = scalar_select %p35, %s36, %s37
    %p41 = pneg %p35
    %p42 = scmp.eq.s32.totalorder %s26, 1
    %p43 = por %p41, %p42
    %p44 = scmp.ne.s32.totalorder %s36, %s39
    %p45 = scmp.eq.s32.totalorder %s26, 0
    %p46 = por %p44, %p45
    %p47 = scmp.ne.s32.totalorder %s36, %s39
    %p48 = scmp.eq.s32.totalorder %s31, 1
    %p49 = por %p47, %p48
    %p50 = scmp.ne.s32.totalorder %s39, %s40
    %p51 = scmp.eq.s32.totalorder %s31, 0
    %p52 = por %p50, %p51
    %p53 = scmp.ne.s32.totalorder %s39, %s40
    %p54 = scmp.eq.s32.totalorder %s32, 1
    %p55 = por %p53, %p54
    %p57 = scmp.ne.s32.totalorder %s40, %s56
    %p58 = scmp.eq.s32.totalorder %s32, 0
    %p59 = por %p57, %p58
    %s60 = ssub.s32 %s26, %s33
    %p61 = scmp.eq.s32.totalorder %s60, 0
    %s63 = sadd.s32 %s62, 1
    %s64 = scalar_select %p61, %s62, %s63
    %p67 = pneg %p61
    %p68 = scmp.eq.s32.totalorder %s26, 1
    %p69 = por %p67, %p68
    %p70 = scmp.ne.s32.totalorder %s62, %s65
    %p71 = scmp.eq.s32.totalorder %s26, 0
    %p72 = por %p70, %p71
    %p73 = scmp.ne.s32.totalorder %s62, %s65
    %p74 = scmp.eq.s32.totalorder %s31, 1
    %p75 = por %p73, %p74
    %p76 = scmp.ne.s32.totalorder %s65, %s66
    %p77 = scmp.eq.s32.totalorder %s31, 0
    %p78 = por %p76, %p77
    %p79 = scmp.ne.s32.totalorder %s65, %s66
    %p80 = scmp.eq.s32.totalorder %s32, 1
    %p81 = por %p79, %p80
    %p83 = scmp.ne.s32.totalorder %s66, %s82
    %p84 = scmp.eq.s32.totalorder %s32, 0
    %p85 = por %p83, %p84
    %s87 = sadd.s32 %s86, 1
    %p90 = scmp.eq.s32.totalorder %s26, 1
    %p91 = scmp.ne.s32.totalorder %s86, %s88
    %p92 = scmp.eq.s32.totalorder %s26, 0
    %p93 = por %p91, %p92
    %p94 = scmp.ne.s32.totalorder %s86, %s88
    %p95 = scmp.eq.s32.totalorder %s31, 1
    %p96 = por %p94, %p95
    %p97 = scmp.ne.s32.totalorder %s88, %s89
    %p98 = scmp.eq.s32.totalorder %s31, 0
    %p99 = por %p97, %p98
    %p100 = scmp.ne.s32.totalorder %s88, %s89
    %p101 = scmp.eq.s32.totalorder %s32, 1
    %p102 = por %p100, %p101
    %p104 = scmp.ne.s32.totalorder %s89, %s103
    %p105 = scmp.eq.s32.totalorder %s32, 0
    %p106 = por %p104, %p105
    %s108 = sadd.s32 %s107, 1
    %p111 = scmp.eq.s32.totalorder %s26, 1
    %p112 = scmp.ne.s32.totalorder %s107, %s109
    %p113 = scmp.eq.s32.totalorder %s26, 0
    %p114 = por %p112, %p113
    %p115 = scmp.ne.s32.totalorder %s107, %s109
    %p116 = scmp.eq.s32.totalorder %s31, 1
    %p117 = por %p115, %p116
    %p118 = scmp.ne.s32.totalorder %s109, %s110
    %p119 = scmp.eq.s32.totalorder %s31, 0
    %p120 = por %p118, %p119
    %p121 = scmp.ne.s32.totalorder %s109, %s110
    %p122 = scmp.eq.s32.totalorder %s32, 1
    %p123 = por %p121, %p122
    %p125 = scmp.ne.s32.totalorder %s110, %s124
    %p126 = scmp.eq.s32.totalorder %s32, 0
    %p127 = por %p125, %p126
    %s129 = sadd.s32 %s128, 1
    %p132 = scmp.eq.s32.totalorder %s26, 1
    %p133 = scmp.ne.s32.totalorder %s128, %s130
    %p134 = scmp.eq.s32.totalorder %s26, 0
    %p135 = por %p133, %p134
    %p136 = scmp.ne.s32.totalorder %s128, %s130
    %p137 = scmp.eq.s32.totalorder %s31, 1
    %p138 = por %p136, %p137
    %p139 = scmp.ne.s32.totalorder %s130, %s131
    %p140 = scmp.eq.s32.totalorder %s31, 0
    %p141 = por %p139, %p140
    %p142 = scmp.ne.s32.totalorder %s130, %s131
    %p143 = scmp.eq.s32.totalorder %s32, 1
    %p144 = por %p142, %p143
    %p146 = scmp.ne.s32.totalorder %s131, %s145
    %p147 = scmp.eq.s32.totalorder %s32, 0
    %p148 = por %p146, %p147
    %s150 = sadd.s32 %s149, 1
    %p153 = scmp.eq.s32.totalorder %s26, 1
    %p154 = scmp.ne.s32.totalorder %s149, %s151
    %p155 = scmp.eq.s32.totalorder %s26, 0
    %p156 = por %p154, %p155
    %p157 = scmp.ne.s32.totalorder %s149, %s151
    %p158 = scmp.eq.s32.totalorder %s31, 1
    %p159 = por %p157, %p158
    %p160 = scmp.ne.s32.totalorder %s151, %s152
    %p161 = scmp.eq.s32.totalorder %s31, 0
    %p162 = por %p160, %p161
    %p163 = scmp.ne.s32.totalorder %s151, %s152
    %p164 = scmp.eq.s32.totalorder %s32, 1
    %p165 = por %p163, %p164
    %p167 = scmp.ne.s32.totalorder %s152, %s166
    %p168 = scmp.eq.s32.totalorder %s32, 0
    %p169 = por %p167, %p168
    %s171 = sadd.s32 %s170, 1
    %p174 = scmp.eq.s32.totalorder %s26, 1
    %p175 = scmp.ne.s32.totalorder %s170, %s172
    %p176 = scmp.eq.s32.totalorder %s26, 0
    %p177 = por %p175, %p176
    %p178 = scmp.ne.s32.totalorder %s170, %s172
    %p179 = scmp.eq.s32.totalorder %s31, 1
    %p180 = por %p178, %p179
    %p181 = scmp.ne.s32.totalorder %s172, %s173
    %p182 = scmp.eq.s32.totalorder %s31, 0
    %p183 = por %p181, %p182
    %p184 = scmp.ne.s32.totalorder %s172, %s173
    %p185 = scmp.eq.s32.totalorder %s32, 1
    %p186 = por %p184, %p185
    %p188 = scmp.ne.s32.totalorder %s173, %s187
    %p189 = scmp.eq.s32.totalorder %s32, 0
    %p190 = por %p188, %p189
    %s192 = sadd.s32 %s191, 1
    %p195 = scmp.eq.s32.totalorder %s26, 1
    %p196 = scmp.ne.s32.totalorder %s191, %s193
    %p197 = scmp.eq.s32.totalorder %s26, 0
    %p198 = por %p196, %p197
    %p199 = scmp.ne.s32.totalorder %s191, %s193
    %p200 = scmp.eq.s32.totalorder %s31, 1
    %p201 = por %p199, %p200
    %p202 = scmp.ne.s32.totalorder %s193, %s194
    %p203 = scmp.eq.s32.totalorder %s31, 0
    %p204 = por %p202, %p203
    %p205 = scmp.ne.s32.totalorder %s193, %s194
    %p206 = scmp.eq.s32.totalorder %s32, 1
    %p207 = por %p205, %p206
    %p209 = scmp.ne.s32.totalorder %s194, %s208
    %p210 = scmp.eq.s32.totalorder %s32, 0
    %p211 = por %p209, %p210
    %s213 = sadd.s32 %s212, 1
    %p216 = scmp.eq.s32.totalorder %s26, 1
    %p217 = scmp.ne.s32.totalorder %s212, %s214
    %p218 = scmp.eq.s32.totalorder %s26, 0
    %p219 = por %p217, %p218
    %p220 = scmp.ne.s32.totalorder %s212, %s214
    %p221 = scmp.eq.s32.totalorder %s31, 1
    %p222 = por %p220, %p221
    %p223 = scmp.ne.s32.totalorder %s214, %s215
    %p224 = scmp.eq.s32.totalorder %s31, 0
    %p225 = por %p223, %p224
    %p226 = scmp.ne.s32.totalorder %s214, %s215
    %p227 = scmp.eq.s32.totalorder %s32, 1
    %p228 = por %p226, %p227
    %p230 = scmp.ne.s32.totalorder %s215, %s229
    %p231 = scmp.eq.s32.totalorder %s32, 0
    %p232 = por %p230, %p231
    %s234 = sadd.s32 %s233, 1
    %p237 = scmp.eq.s32.totalorder %s26, 1
    %p238 = scmp.ne.s32.totalorder %s233, %s235
    %p239 = scmp.eq.s32.totalorder %s26, 0
    %p240 = por %p238, %p239
    %p241 = scmp.ne.s32.totalorder %s233, %s235
    %p242 = scmp.eq.s32.totalorder %s31, 1
    %p243 = por %p241, %p242
    %p244 = scmp.ne.s32.totalorder %s235, %s236
    %p245 = scmp.eq.s32.totalorder %s31, 0
    %p246 = por %p244, %p245
    %p247 = scmp.ne.s32.totalorder %s235, %s236
    %p248 = scmp.eq.s32.totalorder %s32, 1
    %p249 = por %p247, %p248
    %p251 = scmp.ne.s32.totalorder %s236, %s250
    %p252 = scmp.eq.s32.totalorder %s32, 0
    %p253 = por %p251, %p252
    %s255 = sadd.s32 %s254, 1
    %p258 = scmp.eq.s32.totalorder %s26, 1
    %p259 = scmp.ne.s32.totalorder %s254, %s256
    %p260 = scmp.eq.s32.totalorder %s26, 0
    %p261 = por %p259, %p260
    %p262 = scmp.ne.s32.totalorder %s254, %s256
    %p263 = scmp.eq.s32.totalorder %s31, 1
    %p264 = por %p262, %p263
    %p265 = scmp.ne.s32.totalorder %s256, %s257
    %p266 = scmp.eq.s32.totalorder %s31, 0
    %p267 = por %p265, %p266
    %p268 = scmp.ne.s32.totalorder %s256, %s257
    %p269 = scmp.eq.s32.totalorder %s32, 1
    %p270 = por %p268, %p269
    %p272 = scmp.ne.s32.totalorder %s257, %s271
    %p273 = scmp.eq.s32.totalorder %s32, 0
    %p274 = por %p272, %p273
    %s276 = sadd.s32 %s275, 1
    %p279 = scmp.eq.s32.totalorder %s26, 1
    %p280 = scmp.ne.s32.totalorder %s275, %s277
    %p281 = scmp.eq.s32.totalorder %s26, 0
    %p282 = por %p280, %p281
    %p283 = scmp.ne.s32.totalorder %s275, %s277
    %p284 = scmp.eq.s32.totalorder %s31, 1
    %p285 = por %p283, %p284
    %p286 = scmp.ne.s32.totalorder %s277, %s278
    %p287 = scmp.eq.s32.totalorder %s31, 0
    %p288 = por %p286, %p287
    %p289 = scmp.ne.s32.totalorder %s277, %s278
    %p290 = scmp.eq.s32.totalorder %s32, 1
    %p291 = por %p289, %p290
    %p293 = scmp.ne.s32.totalorder %s278, %s292
    %p294 = scmp.eq.s32.totalorder %s32, 0
    %p295 = por %p293, %p294
    %s297 = sadd.s32 %s296, 1
    %p300 = scmp.eq.s32.totalorder %s26, 1
    %p301 = scmp.ne.s32.totalorder %s296, %s298
    %p302 = scmp.eq.s32.totalorder %s26, 0
    %p303 = por %p301, %p302
    %p304 = scmp.ne.s32.totalorder %s296, %s298
    %p305 = scmp.eq.s32.totalorder %s31, 1
    %p306 = por %p304, %p305
    %p307 = scmp.ne.s32.totalorder %s298, %s299
    %p308 = scmp.eq.s32.totalorder %s31, 0
    %p309 = por %p307, %p308
    %p310 = scmp.ne.s32.totalorder %s298, %s299
    %p311 = scmp.eq.s32.totalorder %s32, 1
    %p312 = por %p310, %p311
    %p314 = scmp.ne.s32.totalorder %s299, %s313
    %p315 = scmp.eq.s32.totalorder %s32, 0
    %p316 = por %p314, %p315
    %s318 = sadd.s32 %s317, 1
    %p321 = scmp.eq.s32.totalorder %s26, 1
    %p322 = scmp.ne.s32.totalorder %s317, %s319
    %p323 = scmp.eq.s32.totalorder %s26, 0
    %p324 = por %p322, %p323
    %p325 = scmp.ne.s32.totalorder %s317, %s319
    %p326 = scmp.eq.s32.totalorder %s31, 1
    %p327 = por %p325, %p326
    %p328 = scmp.ne.s32.totalorder %s319, %s320
    %p329 = scmp.eq.s32.totalorder %s31, 0
    %p330 = por %p328, %p329
    %p331 = scmp.ne.s32.totalorder %s319, %s320
    %p332 = scmp.eq.s32.totalorder %s32, 1
    %p333 = por %p331, %p332
    %p335 = scmp.ne.s32.totalorder %s320, %s334
    %p336 = scmp.eq.s32.totalorder %s32, 0
    %p337 = por %p335, %p336
    %s339 = sadd.s32 %s338, 1
    %p342 = scmp.eq.s32.totalorder %s26, 1
    %p343 = scmp.ne.s32.totalorder %s338, %s340
    %p344 = scmp.eq.s32.totalorder %s26, 0
    %p345 = por %p343, %p344
    %p346 = scmp.ne.s32.totalorder %s338, %s340
    %p347 = scmp.eq.s32.totalorder %s31, 1
    %p348 = por %p346, %p347
    %p349 = scmp.ne.s32.totalorder %s340, %s341
    %p350 = scmp.eq.s32.totalorder %s31, 0
    %p351 = por %p349, %p350
    %p352 = scmp.ne.s32.totalorder %s340, %s341
    %p353 = scmp.eq.s32.totalorder %s32, 1
    %p354 = por %p352, %p353
    %p356 = scmp.ne.s32.totalorder %s341, %s355
    %p357 = scmp.eq.s32.totalorder %s32, 0
    %p358 = por %p356, %p357
    %s360 = sadd.s32 %s359, 1
    %p363 = scmp.eq.s32.totalorder %s26, 1
    %p364 = scmp.ne.s32.totalorder %s359, %s361
    %p365 = scmp.eq.s32.totalorder %s26, 0
    %p366 = por %p364, %p365
    %p367 = scmp.ne.s32.totalorder %s359, %s361
    %p368 = scmp.eq.s32.totalorder %s31, 1
    %p369 = por %p367, %p368
    %p370 = scmp.ne.s32.totalorder %s361, %s362
    %p371 = scmp.eq.s32.totalorder %s31, 0
    %p372 = por %p370, %p371
    %p373 = scmp.ne.s32.totalorder %s361, %s362
    %p374 = scmp.eq.s32.totalorder %s32, 1
    %p375 = por %p373, %p374
    %p377 = scmp.ne.s32.totalorder %s362, %s376
    %p378 = scmp.eq.s32.totalorder %s32, 0
    %p379 = por %p377, %p378
    %s381 = sadd.s32 %s380, 1
    %p384 = scmp.eq.s32.totalorder %s26, 1
    %p385 = scmp.ne.s32.totalorder %s380, %s382
    %p386 = scmp.eq.s32.totalorder %s26, 0
    %p387 = por %p385, %p386
    %p388 = scmp.ne.s32.totalorder %s380, %s382
    %p389 = scmp.eq.s32.totalorder %s31, 1
    %p390 = por %p388, %p389
    %p391 = scmp.ne.s32.totalorder %s382, %s383
    %p392 = scmp.eq.s32.totalorder %s31, 0
    %p393 = por %p391, %p392
    %p394 = scmp.ne.s32.totalorder %s382, %s383
    %p395 = scmp.eq.s32.totalorder %s32, 1
    %p396 = por %p394, %p395
    %p398 = scmp.ne.s32.totalorder %s383, %s397
    %p399 = scmp.eq.s32.totalorder %s32, 0
    %p400 = por %p398, %p399
    %s402 = sadd.s32 %s401, 1
    %p405 = scmp.eq.s32.totalorder %s26, 1
    %p406 = scmp.ne.s32.totalorder %s401, %s403
    %p407 = scmp.eq.s32.totalorder %s26, 0
    %p408 = por %p406, %p407
    %p409 = scmp.ne.s32.totalorder %s401, %s403
    %p410 = scmp.eq.s32.totalorder %s31, 1
    %p411 = por %p409, %p410
    %p412 = scmp.ne.s32.totalorder %s403, %s404
    %p413 = scmp.eq.s32.totalorder %s31, 0
    %p414 = por %p412, %p413
    %p415 = scmp.ne.s32.totalorder %s403, %s404
    %p416 = scmp.eq.s32.totalorder %s32, 1
    %p417 = por %p415, %p416
    %p419 = scmp.ne.s32.totalorder %s404, %s418
    %p420 = scmp.eq.s32.totalorder %s32, 0
    %p421 = por %p419, %p420
    %s423 = sadd.s32 %s422, 1
    %p426 = scmp.eq.s32.totalorder %s26, 1
    %p427 = scmp.ne.s32.totalorder %s422, %s424
    %p428 = scmp.eq.s32.totalorder %s26, 0
    %p429 = por %p427, %p428
    %p430 = scmp.ne.s32.totalorder %s422, %s424
    %p431 = scmp.eq.s32.totalorder %s31, 1
    %p432 = por %p430, %p431
    %p433 = scmp.ne.s32.totalorder %s424, %s425
    %p434 = scmp.eq.s32.totalorder %s31, 0
    %p435 = por %p433, %p434
    %p436 = scmp.ne.s32.totalorder %s424, %s425
    %p437 = scmp.eq.s32.totalorder %s32, 1
    %p438 = por %p436, %p437
    %p440 = scmp.ne.s32.totalorder %s425, %s439
    %p441 = scmp.eq.s32.totalorder %s32, 0
    %p442 = por %p440, %p441
    %s444 = sadd.s32 %s443, 1
    %p447 = scmp.eq.s32.totalorder %s26, 1
    %p448 = scmp.ne.s32.totalorder %s443, %s445
    %p449 = scmp.eq.s32.totalorder %s26, 0
    %p450 = por %p448, %p449
    %p451 = scmp.ne.s32.totalorder %s443, %s445
    %p452 = scmp.eq.s32.totalorder %s31, 1
    %p453 = por %p451, %p452
    %p454 = scmp.ne.s32.totalorder %s445, %s446
    %p455 = scmp.eq.s32.totalorder %s31, 0
    %p456 = por %p454, %p455
    %p457 = scmp.ne.s32.totalorder %s445, %s446
    %p458 = scmp.eq.s32.totalorder %s32, 1
    %p459 = por %p457, %p458
    %p461 = scmp.ne.s32.totalorder %s446, %s460
    %p462 = scmp.eq.s32.totalorder %s32, 0
    %p463 = por %p461, %p462
    %s464 = ssub.s32 %s26, %s33
    %p465 = scmp.eq.s32.totalorder %s464, 0
    %s467 = sadd.s32 %s466, 1
    %s468 = scalar_select %p465, %s466, %s467
    %p471 = pneg %p465
    %p472 = scmp.eq.s32.totalorder %s26, 1
    %p473 = por %p471, %p472
    %p474 = scmp.ne.s32.totalorder %s466, %s469
    %p475 = scmp.eq.s32.totalorder %s26, 0
    %p476 = por %p474, %p475
    %p477 = scmp.ne.s32.totalorder %s466, %s469
    %p478 = scmp.eq.s32.totalorder %s31, 1
    %p479 = por %p477, %p478
    %p480 = scmp.ne.s32.totalorder %s469, %s470
    %p481 = scmp.eq.s32.totalorder %s31, 0
    %p482 = por %p480, %p481
    %p483 = scmp.ne.s32.totalorder %s469, %s470
    %p484 = scmp.eq.s32.totalorder %s32, 1
    %p485 = por %p483, %p484
    %p487 = scmp.ne.s32.totalorder %s470, %s486
    %p488 = scmp.eq.s32.totalorder %s32, 0
    %p489 = por %p487, %p488
    %p490 = scmp.le.s32.totalorder 1, %s26
    %p491 = scmp.lt.s32.totalorder %s26, 3
    %p492 = pnand %p490, %p491
    %p493 = pneg %p492
    // Predicated region
    $region9: #{cond_res_block.1} parent=5 // pred_check
      _
    $region10: #{cond_res_block.1} parent=5 // pred_check_branch
      %495 = sbr.rel (%p492) target = $region12
    $region11: #{cond_res_block.1} parent=5 // pred_region
      %s496 = ssub.s32 %s26, 1
      // Predicated region
      $region13: #{cond_res_block.1} parent=11 // pred_check
        %p497 = pneg %p99
      $region14: #{cond_res_block.1} parent=11 // pred_check_branch
        %499 = sbr.rel (%p497) target = $region16
      $region15: #{cond_res_block.1} parent=11 // pred_region
        _
      $region16: #{cond_res_block.1} parent=11 // pred_fallthru
        _
      // Predicated region
      $region17: #{cond_res_block.1} parent=11 // pred_check
        %p500 = pneg %p120
      $region18: #{cond_res_block.1} parent=11 // pred_check_branch
        %502 = sbr.rel (%p500) target = $region20
      $region19: #{cond_res_block.1} parent=11 // pred_region
        _
      $region20: #{cond_res_block.1} parent=11 // pred_fallthru
        _
      // Predicated region
      $region21: #{cond_res_block.1} parent=11 // pred_check
        %p503 = pneg %p141
      $region22: #{cond_res_block.1} parent=11 // pred_check_branch
        %505 = sbr.rel (%p503) target = $region24
      $region23: #{cond_res_block.1} parent=11 // pred_region
        _
      $region24: #{cond_res_block.1} parent=11 // pred_fallthru
        _
      // Predicated region
      $region25: #{cond_res_block.1} parent=11 // pred_check
        %p506 = pneg %p162
      $region26: #{cond_res_block.1} parent=11 // pred_check_branch
        %508 = sbr.rel (%p506) target = $region28
      $region27: #{cond_res_block.1} parent=11 // pred_region
        _
      $region28: #{cond_res_block.1} parent=11 // pred_fallthru
        _
      // Predicated region
      $region29: #{cond_res_block.1} parent=11 // pred_check
        %p509 = pneg %p183
      $region30: #{cond_res_block.1} parent=11 // pred_check_branch
        %511 = sbr.rel (%p509) target = $region32
      $region31: #{cond_res_block.1} parent=11 // pred_region
        _
      $region32: #{cond_res_block.1} parent=11 // pred_fallthru
        _
      // Predicated region
      $region33: #{cond_res_block.1} parent=11 // pred_check
        %p512 = pneg %p204
      $region34: #{cond_res_block.1} parent=11 // pred_check_branch
        %514 = sbr.rel (%p512) target = $region36
      $region35: #{cond_res_block.1} parent=11 // pred_region
        _
      $region36: #{cond_res_block.1} parent=11 // pred_fallthru
        _
      // Predicated region
      $region37: #{cond_res_block.1} parent=11 // pred_check
        %p515 = pneg %p225
      $region38: #{cond_res_block.1} parent=11 // pred_check_branch
        %517 = sbr.rel (%p515) target = $region40
      $region39: #{cond_res_block.1} parent=11 // pred_region
        _
      $region40: #{cond_res_block.1} parent=11 // pred_fallthru
        _
      // Predicated region
      $region41: #{cond_res_block.1} parent=11 // pred_check
        %p518 = pneg %p246
      $region42: #{cond_res_block.1} parent=11 // pred_check_branch
        %520 = sbr.rel (%p518) target = $region44
      $region43: #{cond_res_block.1} parent=11 // pred_region
        _
      $region44: #{cond_res_block.1} parent=11 // pred_fallthru
        _
      // Predicated region
      $region45: #{cond_res_block.1} parent=11 // pred_check
        %p521 = pneg %p267
      $region46: #{cond_res_block.1} parent=11 // pred_check_branch
        %523 = sbr.rel (%p521) target = $region48
      $region47: #{cond_res_block.1} parent=11 // pred_region
        _
      $region48: #{cond_res_block.1} parent=11 // pred_fallthru
        _
      // Predicated region
      $region49: #{cond_res_block.1} parent=11 // pred_check
        %p524 = pneg %p288
      $region50: #{cond_res_block.1} parent=11 // pred_check_branch
        %526 = sbr.rel (%p524) target = $region52
      $region51: #{cond_res_block.1} parent=11 // pred_region
        _
      $region52: #{cond_res_block.1} parent=11 // pred_fallthru
        _
      // Predicated region
      $region53: #{cond_res_block.1} parent=11 // pred_check
        %p527 = pneg %p309
      $region54: #{cond_res_block.1} parent=11 // pred_check_branch
        %529 = sbr.rel (%p527) target = $region56
      $region55: #{cond_res_block.1} parent=11 // pred_region
        _
      $region56: #{cond_res_block.1} parent=11 // pred_fallthru
        _
      // Predicated region
      $region57: #{cond_res_block.1} parent=11 // pred_check
        %p530 = pneg %p330
      $region58: #{cond_res_block.1} parent=11 // pred_check_branch
        %532 = sbr.rel (%p530) target = $region60
      $region59: #{cond_res_block.1} parent=11 // pred_region
        _
      $region60: #{cond_res_block.1} parent=11 // pred_fallthru
        _
      // Predicated region
      $region61: #{cond_res_block.1} parent=11 // pred_check
        %p533 = pneg %p351
      $region62: #{cond_res_block.1} parent=11 // pred_check_branch
        %535 = sbr.rel (%p533) target = $region64
      $region63: #{cond_res_block.1} parent=11 // pred_region
        _
      $region64: #{cond_res_block.1} parent=11 // pred_fallthru
        _
      // Predicated region
      $region65: #{cond_res_block.1} parent=11 // pred_check
        %p536 = pneg %p372
      $region66: #{cond_res_block.1} parent=11 // pred_check_branch
        %538 = sbr.rel (%p536) target = $region68
      $region67: #{cond_res_block.1} parent=11 // pred_region
        _
      $region68: #{cond_res_block.1} parent=11 // pred_fallthru
        _
      // Predicated region
      $region69: #{cond_res_block.1} parent=11 // pred_check
        %p539 = pneg %p393
      $region70: #{cond_res_block.1} parent=11 // pred_check_branch
        %541 = sbr.rel (%p539) target = $region72
      $region71: #{cond_res_block.1} parent=11 // pred_region
        _
      $region72: #{cond_res_block.1} parent=11 // pred_fallthru
        _
      // Predicated region
      $region73: #{cond_res_block.1} parent=11 // pred_check
        %p542 = pneg %p414
      $region74: #{cond_res_block.1} parent=11 // pred_check_branch
        %544 = sbr.rel (%p542) target = $region76
      $region75: #{cond_res_block.1} parent=11 // pred_region
        _
      $region76: #{cond_res_block.1} parent=11 // pred_fallthru
        _
      // Predicated region
      $region77: #{cond_res_block.1} parent=11 // pred_check
        %p545 = pneg %p435
      $region78: #{cond_res_block.1} parent=11 // pred_check_branch
        %547 = sbr.rel (%p545) target = $region80
      $region79: #{cond_res_block.1} parent=11 // pred_region
        _
      $region80: #{cond_res_block.1} parent=11 // pred_fallthru
        _
      // Predicated region
      $region81: #{cond_res_block.1} parent=11 // pred_check
        %p548 = pneg %p456
      $region82: #{cond_res_block.1} parent=11 // pred_check_branch
        %550 = sbr.rel (%p548) target = $region84
      $region83: #{cond_res_block.1} parent=11 // pred_region
        _
      $region84: #{cond_res_block.1} parent=11 // pred_fallthru
        _
    $region12: #{cond_res_block.1} parent=5 // pred_fallthru
      _
    %p551 = scmp.lt.s32.totalorder %s26, 2
    // Predicated region
    $region85: #{cond_res_block.1} parent=5 // pred_check
      %p552 = pneg %p551
    $region86: #{cond_res_block.1} parent=5 // pred_check_branch
      %554 = sbr.rel (%p552) target = $region88
    $region87: #{cond_res_block.1} parent=5 // pred_region
      // Predicated region
      $region89: #{cond_res_block.1} parent=87 // pred_check
        %p555 = pneg %p46
      $region90: #{cond_res_block.1} parent=87 // pred_check_branch
        %557 = sbr.rel (%p555) target = $region92
      $region91: #{cond_res_block.1} parent=87 // pred_region
        %p558 = scmp.lt.s32.totalorder %s26, 1
        %s559 = scalar_select %p558, %s26, 1
        %s560 = smul.addr %s559, 2
        %s561 = smul.addr %s560, 8
        %s562 = scalar_lea.vmem %s0, %s561
      $region92: #{cond_res_block.1} parent=87 // pred_fallthru
        _
      // Predicated region
      $region93: #{cond_res_block.1} parent=87 // pred_check
        %p563 = pneg %p72
      $region94: #{cond_res_block.1} parent=87 // pred_check_branch
        %565 = sbr.rel (%p563) target = $region96
      $region95: #{cond_res_block.1} parent=87 // pred_region
        %p566 = scmp.lt.s32.totalorder %s26, 1
        %s567 = scalar_select %p566, %s26, 1
        %s568 = scalar_lea.vmem %s1, %s567
      $region96: #{cond_res_block.1} parent=87 // pred_fallthru
        _
    $region88: #{cond_res_block.1} parent=5 // pred_fallthru
      _
    %p569 = scmp.le.s32.totalorder 1, %s26
    %p570 = scmp.lt.s32.totalorder %s26, 3
    %p571 = pnand %p569, %p570
    %p572 = pneg %p571
    // Predicated region
    $region97: #{cond_res_block.1} parent=5 // pred_check
      _
    $region98: #{cond_res_block.1} parent=5 // pred_check_branch
      %574 = sbr.rel (%p571) target = $region100
    $region99: #{cond_res_block.1} parent=5 // pred_region
      %s575 = ssub.s32 %s26, 1
      %p576 = scmp.lt.s32.totalorder %s31, 1
      %s577 = scalar_select %p576, %s31, 1
      %s578 = smul.addr %s577, 2
      %s579 = smul.addr %s578, 8
      %s580 = scalar_lea.vmem %s0, %s579
      %p581 = pneg %p52
      %p582 = pneg %p49
      %p583 = scmp.lt.s32.totalorder %s31, 1
      %s584 = scalar_select %p583, %s31, 1
      %s585 = scalar_lea.vmem %s1, %s584
      %p586 = pneg %p78
      %p587 = pneg %p75
      %p588 = pneg %p99
      %p589 = pneg %p96
      %p590 = pneg %p120
      %p591 = pneg %p117
      %p592 = pneg %p141
      %p593 = pneg %p138
      %p594 = pneg %p162
      %p595 = pneg %p159
      %p596 = pneg %p183
      %p597 = pneg %p180
      %p598 = pneg %p204
      %p599 = pneg %p201
      %p600 = pneg %p225
      %p601 = pneg %p222
      %p602 = pneg %p246
      %p603 = pneg %p243
      %p604 = pneg %p267
      %p605 = pneg %p264
      %p606 = pneg %p288
      %p607 = pneg %p285
      %p608 = pneg %p309
      %p609 = pneg %p306
      %p610 = pneg %p330
      %p611 = pneg %p327
      %p612 = pneg %p351
      %p613 = pneg %p348
      %p614 = pneg %p372
      %p615 = pneg %p369
      %p616 = pneg %p393
      %p617 = pneg %p390
      %p618 = pneg %p414
      %p619 = pneg %p411
      %p620 = pneg %p435
      %p621 = pneg %p432
      %p622 = pneg %p456
      %p623 = pneg %p453
      %p624 = pneg %p482
      %p625 = pneg %p479
      %p626 = scmp.lt.s32.totalorder %s31, 1
      %s627 = scalar_select %p626, %s31, 1
      %s628 = smul.addr %s627, 8
      %s629 = scalar_lea.vmem %s20, %s628
      %p630 = scmp.lt.s32.totalorder %s31, 1
      %s631 = scalar_select %p630, %s31, 1
      %s632 = smul.addr %s631, 2
      %s633 = smul.addr %s632, 8
      %s634 = scalar_lea.vmem %s0, %s633
      %p635 = scmp.lt.s32.totalorder %s31, 1
      %s636 = scalar_select %p635, %s31, 1
      %s637 = scalar_lea.vmem %s1, %s636
      %p638 = scmp.lt.s32.totalorder %s31, 1
      %s639 = scalar_select %p638, %s31, 1
      %s640 = smul.addr %s639, 8
      %s641 = scalar_lea.vmem %s20, %s640
      %v643 = vld [vmem:[%s634] sm:$0xff]
      %v644 = vld [vmem:[%s634 + $0x8] sm:$0xff]
      %v645 = vld [vmem:[%s637] sm:$0x1]
      %v646 = vpack.c.bf16 %v644, %v643
      %v648 = vshrl.u32 %v646, 16
      %v650 = vrot.slane %v648, 7
      %v651 = vshll.u32 %v646, 16
      %v653 = vor.u32 %v650, %v651
      %vm655 = vcmask 1040384
      %vm656 = vsmask.f32 256
      %vm657 = vmand %vm655, %vm656
      %v658 = vsel %vm657, 0, %v653
      %v659 = vrot.slane %v651, 1
      %v660 = vor.u32 %v648, %v659
      %vm662 = vcmask 1047552
      %vm663 = vsmask.f32 7424
      %vm664 = vmand %vm662, %vm663
      %v665 = vsel %vm664, %v660, 0
      %v666 = vld [vmem:[%s2] sm:$0xf]
      %v667 = vld [vmem:[%s2 + $0x4] sm:$0xf]
      %v668 = vld [vmem:[%s2 + $0x8] sm:$0xf]
      %v669 = vld [vmem:[%s2 + $0xc] sm:$0xf]
      %v670 = vld [vmem:[%s2 + $0x10] sm:$0xf]
      %v671 = vld [vmem:[%s2 + $0x14] sm:$0xf]
      %v672 = vld [vmem:[%s2 + $0x18] sm:$0xf]
      %v673 = vld [vmem:[%s2 + $0x1c] sm:$0xf]
      %v674 = vld [vmem:[%s2 + $0x20] sm:$0xf]
      %v675 = vld [vmem:[%s2 + $0x24] sm:$0xf]
      %v676 = vld [vmem:[%s2 + $0x28] sm:$0xf]
      %v677 = vld [vmem:[%s2 + $0x2c] sm:$0xf]
      %v678 = vld [vmem:[%s2 + $0x30] sm:$0xf]
      %v679 = vld [vmem:[%s2 + $0x34] sm:$0xf]
      %v680 = vld [vmem:[%s2 + $0x38] sm:$0xf]
      %v681 = vld [vmem:[%s2 + $0x3c] sm:$0xf]
      %v682 = vld [vmem:[%s2 + $0x40] sm:$0xf]
      %v683 = vld [vmem:[%s2 + $0x44] sm:$0xf]
      %v684 = vld [vmem:[%s2 + $0x48] sm:$0xf]
      %v685 = vld [vmem:[%s2 + $0x4c] sm:$0xf]
      %v686 = vld [vmem:[%s2 + $0x50] sm:$0xf]
      %v687 = vld [vmem:[%s2 + $0x54] sm:$0xf]
      %v688 = vld [vmem:[%s2 + $0x58] sm:$0xf]
      %v689 = vld [vmem:[%s2 + $0x5c] sm:$0xf]
      %v690 = vld [vmem:[%s2 + $0x60] sm:$0xf]
      %v691 = vld [vmem:[%s2 + $0x64] sm:$0xf]
      %v692 = vld [vmem:[%s2 + $0x68] sm:$0xf]
      %v693 = vld [vmem:[%s2 + $0x6c] sm:$0xf]
      %v694 = vld [vmem:[%s2 + $0x70] sm:$0xf]
      %v695 = vld [vmem:[%s2 + $0x74] sm:$0xf]
      %v696 = vld [vmem:[%s2 + $0x78] sm:$0xf]
      %v697 = vld [vmem:[%s2 + $0x7c] sm:$0xf]
      %v698 = vld [vmem:[%s2 + $0x80] sm:$0xf]
      %v699 = vld [vmem:[%s2 + $0x84] sm:$0xf]
      %v700 = vld [vmem:[%s2 + $0x88] sm:$0xf]
      %v701 = vld [vmem:[%s2 + $0x8c] sm:$0xf]
      %v702 = vld [vmem:[%s2 + $0x90] sm:$0xf]
      %v703 = vld [vmem:[%s2 + $0x94] sm:$0xf]
      %v704 = vld [vmem:[%s2 + $0x98] sm:$0xf]
      %v705 = vld [vmem:[%s2 + $0x9c] sm:$0xf]
      %v706 = vld [vmem:[%s2 + $0xa0] sm:$0xf]
      %v707 = vld [vmem:[%s2 + $0xa4] sm:$0xf]
      %v708 = vld [vmem:[%s2 + $0xa8] sm:$0xf]
      %v709 = vld [vmem:[%s2 + $0xac] sm:$0xf]
      %v710 = vld [vmem:[%s2 + $0xb0] sm:$0xf]
      %v711 = vld [vmem:[%s2 + $0xb4] sm:$0xf]
      %v712 = vld [vmem:[%s2 + $0xb8] sm:$0xf]
      %v713 = vld [vmem:[%s2 + $0xbc] sm:$0xf]
      %v714 = vld [vmem:[%s3] sm:$0x1]
      %v716 = vlaneseq
      %v717 = vshrl.u32 %v716, 7
      %v718 = vsub.s32 0, %v717
      %v719 = vrot.slane %v714, %v718
      %v769 = vunpack.c.l.b16 %v666
      %v770 = vunpack.c.l.b16 %v667
      %v771 = vunpack.c.l.b16 %v668
      %v772 = vunpack.c.l.b16 %v669
      %v773 = vunpack.c.l.b16 %v670
      %v774 = vunpack.c.l.b16 %v671
      %v775 = vunpack.c.l.b16 %v672
      %v776 = vunpack.c.l.b16 %v673
      %v777 = vunpack.c.l.b16 %v674
      %v778 = vunpack.c.l.b16 %v675
      %v779 = vunpack.c.l.b16 %v676
      %v780 = vunpack.c.l.b16 %v677
      %v781 = vunpack.c.l.b16 %v678
      %v782 = vunpack.c.l.b16 %v679
      %v783 = vunpack.c.l.b16 %v680
      %v784 = vunpack.c.l.b16 %v681
      %v785 = vunpack.c.l.b16 %v682
      %v786 = vunpack.c.l.b16 %v683
      %v787 = vunpack.c.l.b16 %v684
      %v788 = vunpack.c.l.b16 %v685
      %v789 = vunpack.c.l.b16 %v686
      %v790 = vunpack.c.l.b16 %v687
      %v791 = vunpack.c.l.b16 %v688
      %v792 = vunpack.c.l.b16 %v689
      %v793 = vunpack.c.l.b16 %v690
      %v794 = vunpack.c.l.b16 %v691
      %v795 = vunpack.c.l.b16 %v692
      %v796 = vunpack.c.l.b16 %v693
      %v797 = vunpack.c.l.b16 %v694
      %v798 = vunpack.c.l.b16 %v695
      %v799 = vunpack.c.l.b16 %v696
      %v800 = vunpack.c.l.b16 %v697
      %v801 = vunpack.c.l.b16 %v698
      %v802 = vunpack.c.l.b16 %v699
      %v803 = vunpack.c.l.b16 %v700
      %v804 = vunpack.c.l.b16 %v701
      %v805 = vunpack.c.l.b16 %v702
      %v806 = vunpack.c.l.b16 %v703
      %v807 = vunpack.c.l.b16 %v704
      %v808 = vunpack.c.l.b16 %v705
      %v809 = vunpack.c.l.b16 %v706
      %v810 = vunpack.c.l.b16 %v707
      %v811 = vunpack.c.l.b16 %v708
      %v812 = vunpack.c.l.b16 %v709
      %v813 = vunpack.c.l.b16 %v710
      %v814 = vunpack.c.l.b16 %v711
      %v815 = vunpack.c.l.b16 %v712
      %v816 = vunpack.c.l.b16 %v713
      %v817 = vpack.c.b16 %v770, %v769
      %v818 = vpack.c.b16 %v772, %v771
      %v819 = vpack.c.b16 %v774, %v773
      %v820 = vpack.c.b16 %v776, %v775
      %v821 = vpack.c.b16 %v778, %v777
      %v822 = vpack.c.b16 %v780, %v779
      %v823 = vpack.c.b16 %v782, %v781
      %v824 = vpack.c.b16 %v784, %v783
      %v825 = vpack.c.b16 %v786, %v785
      %v826 = vpack.c.b16 %v788, %v787
      %v827 = vpack.c.b16 %v790, %v789
      %v828 = vpack.c.b16 %v792, %v791
      %v829 = vpack.c.b16 %v794, %v793
      %v830 = vpack.c.b16 %v796, %v795
      %v831 = vpack.c.b16 %v798, %v797
      %v832 = vpack.c.b16 %v800, %v799
      %v833 = vpack.c.b16 %v802, %v801
      %v834 = vpack.c.b16 %v804, %v803
      %v835 = vpack.c.b16 %v806, %v805
      %v836 = vpack.c.b16 %v808, %v807
      %v837 = vpack.c.b16 %v810, %v809
      %v838 = vpack.c.b16 %v812, %v811
      %v839 = vpack.c.b16 %v814, %v813
      %v840 = vpack.c.b16 %v816, %v815
      %865 = vmatprep.subr.bf16.mxu0 0
      %866 = vmatpush1.bf16.msra.mxu0 %v817
      %867 = vmatprep.subr.bf16.mxu0 0
      %868 = vmatpush1.bf16.msra.mxu0 %v818
      %869 = vmatprep.subr.bf16.mxu0 0
      %870 = vmatpush1.bf16.msra.mxu0 %v819
      %871 = vmatprep.subr.bf16.mxu0 0
      %872 = vmatpush1.bf16.msra.mxu0 %v820
      %873 = vmatprep.subr.bf16.mxu0 0
      %874 = vmatpush1.bf16.msra.mxu0 %v821
      %875 = vmatprep.subr.bf16.mxu0 0
      %876 = vmatpush1.bf16.msra.mxu0 %v822
      %877 = vmatprep.subr.bf16.mxu0 0
      %878 = vmatpush1.bf16.msra.mxu0 %v823
      %879 = vmatprep.subr.bf16.mxu0 0
      %880 = vmatpush1.bf16.msra.mxu0 %v824
      %881 = vmatprep.subr.bf16.mxu0 0
      %882 = vmatpush1.bf16.msra.mxu0 %v825
      %883 = vmatprep.subr.bf16.mxu0 0
      %884 = vmatpush1.bf16.msra.mxu0 %v826
      %885 = vmatprep.subr.bf16.mxu0 0
      %886 = vmatpush1.bf16.msra.mxu0 %v827
      %887 = vmatprep.subr.bf16.mxu0 0
      %888 = vmatpush1.bf16.msra.mxu0 %v828
      %889 = vmatprep.subr.bf16.mxu0 0
      %890 = vmatpush1.bf16.msra.mxu0 %v829
      %891 = vmatprep.subr.bf16.mxu0 0
      %892 = vmatpush1.bf16.msra.mxu0 %v830
      %893 = vmatprep.subr.bf16.mxu0 0
      %894 = vmatpush1.bf16.msra.mxu0 %v831
      %895 = vmatprep.subr.bf16.mxu0 0
      %896 = vmatpush1.bf16.msra.mxu0 %v832
      %897 = vmatprep.mubr.bf16.mxu0 %v646
      %898 = vmatmul.mubr.bf16.gmra.mrb[0].mxu0 %v658
      %v899 = vpop.f32.mrb[0].mxu0
      %v900 = vadd.f32 %v719, %v899
      %v901 = vpop.f32.mrb[0].mxu0
      %v902 = vpop.f32.mrb[0].mxu0
      %v903 = vadd.f32 %v719, %v902
      %v904 = vpop.f32.mrb[0].mxu0
      %905 = vdwg.mxu0
      %906 = vmatprep.subr.bf16.mxu0 0
      %907 = vmatpush1.bf16.msra.mxu0 %v833
      %908 = vmatprep.subr.bf16.mxu0 0
      %909 = vmatpush1.bf16.msra.mxu0 %v834
      %910 = vmatprep.subr.bf16.mxu0 0
      %911 = vmatpush1.bf16.msra.mxu0 %v835
      %912 = vmatprep.subr.bf16.mxu0 0
      %913 = vmatpush1.bf16.msra.mxu0 %v836
      %914 = vmatprep.subr.bf16.mxu0 0
      %915 = vmatpush1.bf16.msra.mxu0 %v837
      %916 = vmatprep.subr.bf16.mxu0 0
      %917 = vmatpush1.bf16.msra.mxu0 %v838
      %918 = vmatprep.subr.bf16.mxu0 0
      %919 = vmatpush1.bf16.msra.mxu0 %v839
      %920 = vmatprep.subr.bf16.mxu0 0
      %921 = vmatpush1.bf16.msra.mxu0 %v840
      %922 = vmatprep.subr.bf16.mxu0 0
      %923 = vmatpush1.bf16.msra.mxu0 0
      %924 = vmatprep.subr.bf16.mxu0 0
      %925 = vmatpush1.bf16.msra.mxu0 0
      %926 = vmatprep.subr.bf16.mxu0 0
      %927 = vmatpush1.bf16.msra.mxu0 0
      %928 = vmatprep.subr.bf16.mxu0 0
      %929 = vmatpush1.bf16.msra.mxu0 0
      %930 = vmatprep.subr.bf16.mxu0 0
      %931 = vmatpush1.bf16.msra.mxu0 0
      %932 = vmatprep.subr.bf16.mxu0 0
      %933 = vmatpush1.bf16.msra.mxu0 0
      %934 = vmatprep.subr.bf16.mxu0 0
      %935 = vmatpush1.bf16.msra.mxu0 0
      %936 = vmatprep.subr.bf16.mxu0 0
      %937 = vmatpush1.bf16.msra.mxu0 0
      %938 = vmatprep.mubr.bf16.mxu0 0
      %939 = vmatmul.mubr.bf16.gmra.mrb[0].mxu0 %v665
      %v940 = vpop.f32.mrb[0].mxu0
      %v941 = vadd.f32 %v900, %v940
      %v942 = vpop.f32.mrb[0].mxu0
      %v943 = vpop.f32.mrb[0].mxu0
      %v944 = vadd.f32 %v903, %v943
      %v945 = vpop.f32.mrb[0].mxu0
      %946 = vdwg.mxu0
      %v947 = vld [vmem:[%s6] sm:$0x1]
      %v948 = vld [vmem:[%s7] sm:$0x1]
      %v949 = vadd.f32 %v941, %v944
      %v950 = vrot.slane %v949, 4
      %v951 = vadd.f32 %v949, %v950
      %v952 = vrot.slane %v951, 2
      %v953 = vadd.f32 %v951, %v952
      %v954 = vrot.slane %v953, 1
      %v955 = vadd.f32 %v953, %v954
      %v956 = vmul.f32 %v941, %v941
      %v957 = vmul.f32 %v944, %v944
      %v958 = vadd.f32 %v956, %v957
      %v959 = vrot.slane %v958, 4
      %v960 = vadd.f32 %v958, %v959
      %v961 = vrot.slane %v960, 2
      %v962 = vadd.f32 %v960, %v961
      %v963 = vrot.slane %v962, 1
      %v964 = vadd.f32 %v962, %v963
      %vm965 = vcmask 1040384
      %v966 = vsel %vm965, %v955, %v964
      %v967 = vld [vmem:[%s16] sm:$0xff]
      %v968 = vld [vmem:[%s16 + $0x8] sm:$0xff]
      %v969 = vld [vmem:[%s16 + $0x10] sm:$0xff]
      %v970 = vld [vmem:[%s16 + $0x18] sm:$0xff]
      %v971 = vld [vmem:[%s16 + $0x20] sm:$0xff]
      %v972 = vld [vmem:[%s16 + $0x28] sm:$0xff]
      %v973 = vld [vmem:[%s16 + $0x30] sm:$0xff]
      %v974 = vld [vmem:[%s16 + $0x38] sm:$0xff]
      %v975 = vld [vmem:[%s16 + $0x40] sm:$0xff]
      %v976 = vld [vmem:[%s16 + $0x48] sm:$0xff]
      %v977 = vld [vmem:[%s16 + $0x50] sm:$0xff]
      %v978 = vld [vmem:[%s16 + $0x58] sm:$0xff]
      %v979 = vld [vmem:[%s16 + $0x60] sm:$0xff]
      %v980 = vld [vmem:[%s16 + $0x68] sm:$0xff]
      %v981 = vld [vmem:[%s16 + $0x70] sm:$0xff]
      %v982 = vld [vmem:[%s16 + $0x78] sm:$0xff]
      %983 = vmatprep.subr.mxu0 0.0
      %984 = vmatpush1.msra.mxu0 %v967
      %985 = vmatprep.subr.mxu0 0.0
      %986 = vmatpush1.msra.mxu0 %v968
      %987 = vmatprep.subr.mxu0 0.0
      %988 = vmatpush1.msra.mxu0 %v969
      %989 = vmatprep.subr.mxu0 0.0
      %990 = vmatpush1.msra.mxu0 %v970
      %991 = vmatprep.subr.mxu0 0.0
      %992 = vmatpush1.msra.mxu0 %v971
      %993 = vmatprep.subr.mxu0 0.0
      %994 = vmatpush1.msra.mxu0 %v972
      %995 = vmatprep.subr.mxu0 0.0
      %996 = vmatpush1.msra.mxu0 %v973
      %997 = vmatprep.subr.mxu0 0.0
      %998 = vmatpush1.msra.mxu0 %v974
      %999 = vmatprep.subr.mxu0 0.0
      %1000 = vmatpush1.msra.mxu0 %v975
      %1001 = vmatprep.subr.mxu0 0.0
      %1002 = vmatpush1.msra.mxu0 %v976
      %1003 = vmatprep.subr.mxu0 0.0
      %1004 = vmatpush1.msra.mxu0 %v977
      %1005 = vmatprep.subr.mxu0 0.0
      %1006 = vmatpush1.msra.mxu0 %v978
      %1007 = vmatprep.subr.mxu0 0.0
      %1008 = vmatpush1.msra.mxu0 %v979
      %1009 = vmatprep.subr.mxu0 0.0
      %1010 = vmatpush1.msra.mxu0 %v980
      %1011 = vmatprep.subr.mxu0 0.0
      %1012 = vmatpush1.msra.mxu0 %v981
      %1013 = vmatprep.subr.mxu0 0.0
      %1014 = vmatpush1.msra.mxu0 %v982
      %1015 = vmatprep.subr.mxu0 0.0
      %1016 = vmatpush1.msra.mxu0 0.0
      %1017 = vmatprep.subr.mxu0 0.0
      %1018 = vmatpush1.msra.mxu0 0.0
      %1019 = vmatprep.subr.mxu0 0.0
      %1020 = vmatpush1.msra.mxu0 0.0
      %1021 = vmatprep.subr.mxu0 0.0
      %1022 = vmatpush1.msra.mxu0 0.0
      %1023 = vmatprep.subr.mxu0 0.0
      %1024 = vmatpush1.msra.mxu0 0.0
      %1025 = vmatprep.subr.mxu0 0.0
      %1026 = vmatpush1.msra.mxu0 0.0
      %1027 = vmatprep.subr.mxu0 0.0
      %1028 = vmatpush1.msra.mxu0 0.0
      %1029 = vmatprep.subr.mxu0 0.0
      %1030 = vmatpush1.msra.mxu0 0.0
      %1031 = vmatprep.subr.mxu0 0.0
      %1032 = vmatpush1.msra.mxu0 0.0
      %1033 = vmatprep.subr.mxu0 0.0
      %1034 = vmatpush1.msra.mxu0 0.0
      %1035 = vmatprep.subr.mxu0 0.0
      %1036 = vmatpush1.msra.mxu0 0.0
      %1037 = vmatprep.subr.mxu0 0.0
      %1038 = vmatpush1.msra.mxu0 0.0
      %1039 = vmatprep.subr.mxu0 0.0
      %1040 = vmatpush1.msra.mxu0 0.0
      %1041 = vmatprep.subr.mxu0 0.0
      %1042 = vmatpush1.msra.mxu0 0.0
      %1043 = vmatprep.subr.mxu0 0.0
      %1044 = vmatpush1.msra.mxu0 0.0
      %1045 = vmatprep.subr.mxu0 0.0
      %1046 = vmatpush1.msra.mxu0 0.0
      %1047 = vmatprep.mubr.f32.mxu0 0.0
      %1048 = vmatmul.mubr.f32.gmra.mrb[0].mxu0 %v966
      %v1049 = vpop.f32.mrb[0].mxu0
      %v1050 = vadd.f32 0.0, %v1049
      %v1051 = vpop.f32.mrb[0].mxu0
      %1052 = vdwg.mxu0
      %v1053 = vmul.f32 %v1050, 0.0009765625
      %v1054 = vld [vmem:[%s17] sm:$0x3]
      %vm1055 = vcmask 15360
      %v1057 = vsel %vm1055, %v1053, 0
      %vm1059 = vcmask 1041408
      %v1061 = vsel %vm1059, %v1054, 0
      %1063 = vmatprep.subr.mxu0 0.0
      %1064 = vmatpush1.msra.mxu0 %v1061
      %1065 = vmatprep.subr.mxu0 0.0
      %1066 = vmatpush1.msra.mxu0 0.0
      %1067 = vmatprep.subr.mxu0 0.0
      %1068 = vmatpush1.msra.mxu0 0.0
      %1069 = vmatprep.subr.mxu0 0.0
      %1070 = vmatpush1.msra.mxu0 0.0
      %1071 = vmatprep.subr.mxu0 0.0
      %1072 = vmatpush1.msra.mxu0 0.0
      %1073 = vmatprep.subr.mxu0 0.0
      %1074 = vmatpush1.msra.mxu0 0.0
      %1075 = vmatprep.subr.mxu0 0.0
      %1076 = vmatpush1.msra.mxu0 0.0
      %1077 = vmatprep.subr.mxu0 0.0
      %1078 = vmatpush1.msra.mxu0 0.0
      %1079 = vmatprep.subr.mxu0 0.0
      %1080 = vmatpush1.msra.mxu0 0.0
      %1081 = vmatprep.subr.mxu0 0.0
      %1082 = vmatpush1.msra.mxu0 0.0
      %1083 = vmatprep.subr.mxu0 0.0
      %1084 = vmatpush1.msra.mxu0 0.0
      %1085 = vmatprep.subr.mxu0 0.0
      %1086 = vmatpush1.msra.mxu0 0.0
      %1087 = vmatprep.subr.mxu0 0.0
      %1088 = vmatpush1.msra.mxu0 0.0
      %1089 = vmatprep.subr.mxu0 0.0
      %1090 = vmatpush1.msra.mxu0 0.0
      %1091 = vmatprep.subr.mxu0 0.0
      %1092 = vmatpush1.msra.mxu0 0.0
      %1093 = vmatprep.subr.mxu0 0.0
      %1094 = vmatpush1.msra.mxu0 0.0
      %1095 = vmatprep.subr.mxu0 0.0
      %1096 = vmatpush1.msra.mxu0 0.0
      %1097 = vmatprep.subr.mxu0 0.0
      %1098 = vmatpush1.msra.mxu0 0.0
      %1099 = vmatprep.subr.mxu0 0.0
      %1100 = vmatpush1.msra.mxu0 0.0
      %1101 = vmatprep.subr.mxu0 0.0
      %1102 = vmatpush1.msra.mxu0 0.0
      %1103 = vmatprep.subr.mxu0 0.0
      %1104 = vmatpush1.msra.mxu0 0.0
      %1105 = vmatprep.subr.mxu0 0.0
      %1106 = vmatpush1.msra.mxu0 0.0
      %1107 = vmatprep.subr.mxu0 0.0
      %1108 = vmatpush1.msra.mxu0 0.0
      %1109 = vmatprep.subr.mxu0 0.0
      %1110 = vmatpush1.msra.mxu0 0.0
      %1111 = vmatprep.subr.mxu0 0.0
      %1112 = vmatpush1.msra.mxu0 0.0
      %1113 = vmatprep.subr.mxu0 0.0
      %1114 = vmatpush1.msra.mxu0 0.0
      %1115 = vmatprep.subr.mxu0 0.0
      %1116 = vmatpush1.msra.mxu0 0.0
      %1117 = vmatprep.subr.mxu0 0.0
      %1118 = vmatpush1.msra.mxu0 0.0
      %1119 = vmatprep.subr.mxu0 0.0
      %1120 = vmatpush1.msra.mxu0 0.0
      %1121 = vmatprep.subr.mxu0 0.0
      %1122 = vmatpush1.msra.mxu0 0.0
      %1123 = vmatprep.subr.mxu0 0.0
      %1124 = vmatpush1.msra.mxu0 0.0
      %1125 = vmatprep.subr.mxu0 0.0
      %1126 = vmatpush1.msra.mxu0 0.0
      %1127 = vmatprep.mubr.f32.mxu0 0.0
      %1128 = vmatmul.mubr.f32.gmra.mrb[0].mxu0 %v1057
      %v1129 = vpop.f32.mrb[0].mxu0
      %v1130 = vadd.f32 0.0, %v1129
      %v1131 = vpop.f32.mrb[0].mxu0
      %1132 = vdwg.mxu0
      %v1133 = vmul.f32 %v1130, %v1130
      %v1135 = vrot.slane %v1133, 7
      %v1137 = vsub.f32 %v1130, %v1135
      %v1138 = vlaneseq
      %v1139 = vshrl.u32 %v1138, 7
      %v1140 = vsub.s32 0, %v1139
      %v1141 = vrot.slane %v1130, %v1140
      %v1142 = vsub.f32 %v941, %v1141
      %v1143 = vsub.f32 %v944, %v1141
      %v1144 = vadd.f32 %v1137, 1e-05
      %v1145 = vrsqrt.pop %v1144
      %v1146 = vlaneseq
      %v1147 = vshrl.u32 %v1146, 7
      %v1148 = vsub.s32 1, %v1147
      %v1149 = vrot.slane %v1145, %v1148
      %v1150 = vmul.f32 %v1142, %v1149
      %v1151 = vmul.f32 %v1143, %v1149
      %v1153 = vlaneseq
      %v1154 = vshrl.u32 %v1153, 7
      %v1155 = vsub.s32 0, %v1154
      %v1156 = vrot.slane %v947, %v1155
      %v1158 = vmul.f32 %v1150, %v1156
      %v1159 = vmul.f32 %v1151, %v1156
      %v1161 = vlaneseq
      %v1162 = vshrl.u32 %v1161, 7
      %v1163 = vsub.s32 0, %v1162
      %v1164 = vrot.slane %v948, %v1163
      %v1166 = vadd.f32 %v1158, %v1164
      %v1167 = vadd.f32 %v1159, %v1164
      %v1168 = vld [vmem:[%s4] sm:$0xff]
      %v1169 = vld [vmem:[%s4 + $0x8] sm:$0xff]
      %v1170 = vld [vmem:[%s4 + $0x10] sm:$0xff]
      %v1171 = vld [vmem:[%s4 + $0x18] sm:$0xff]
      %v1172 = vld [vmem:[%s4 + $0x20] sm:$0xff]
      %v1173 = vld [vmem:[%s4 + $0x28] sm:$0xff]
      %v1174 = vld [vmem:[%s4 + $0x30] sm:$0xff]
      %v1175 = vld [vmem:[%s4 + $0x38] sm:$0xff]
      %v1176 = vld [vmem:[%s5] sm:$0x3]
      %v1178 = vlaneseq
      %v1179 = vshrl.u32 %v1178, 7
      %v1180 = vsub.s32 0, %v1179
      %v1181 = vrot.slane %v1176, %v1180
      %v1182 = vlaneseq
      %v1183 = vshrl.u32 %v1182, 7
      %v1184 = vsub.s32 1, %v1183
      %v1185 = vrot.slane %v1176, %v1184
      %vm1188 = vcmask 261120
      %v1190 = vsel %vm1188, %v645, 0
      %1192 = vmatprep.subr.mxu0 %v1169
      %1193 = vmatpush1.msra.mxu0 %v1168
      %1194 = vmatprep.subr.mxu0 %v1171
      %1195 = vmatpush1.msra.mxu0 %v1170
      %1196 = vmatprep.subr.mxu0 %v1173
      %1197 = vmatpush1.msra.mxu0 %v1172
      %1198 = vmatprep.subr.mxu0 %v1175
      %1199 = vmatpush1.msra.mxu0 %v1174
      %1200 = vmatprep.subr.mxu0 0.0
      %1201 = vmatpush1.msra.mxu0 0.0
      %1202 = vmatprep.subr.mxu0 0.0
      %1203 = vmatpush1.msra.mxu0 0.0
      %1204 = vmatprep.subr.mxu0 0.0
      %1205 = vmatpush1.msra.mxu0 0.0
      %1206 = vmatprep.subr.mxu0 0.0
      %1207 = vmatpush1.msra.mxu0 0.0
      %1208 = vmatprep.subr.mxu0 0.0
      %1209 = vmatpush1.msra.mxu0 0.0
      %1210 = vmatprep.subr.mxu0 0.0
      %1211 = vmatpush1.msra.mxu0 0.0
      %1212 = vmatprep.subr.mxu0 0.0
      %1213 = vmatpush1.msra.mxu0 0.0
      %1214 = vmatprep.subr.mxu0 0.0
      %1215 = vmatpush1.msra.mxu0 0.0
      %1216 = vmatprep.subr.mxu0 0.0
      %1217 = vmatpush1.msra.mxu0 0.0
      %1218 = vmatprep.subr.mxu0 0.0
      %1219 = vmatpush1.msra.mxu0 0.0
      %1220 = vmatprep.subr.mxu0 0.0
      %1221 = vmatpush1.msra.mxu0 0.0
      %1222 = vmatprep.subr.mxu0 0.0
      %1223 = vmatpush1.msra.mxu0 0.0
      %1224 = vmatprep.subr.mxu0 0.0
      %1225 = vmatpush1.msra.mxu0 0.0
      %1226 = vmatprep.subr.mxu0 0.0
      %1227 = vmatpush1.msra.mxu0 0.0
      %1228 = vmatprep.subr.mxu0 0.0
      %1229 = vmatpush1.msra.mxu0 0.0
      %1230 = vmatprep.subr.mxu0 0.0
      %1231 = vmatpush1.msra.mxu0 0.0
      %1232 = vmatprep.subr.mxu0 0.0
      %1233 = vmatpush1.msra.mxu0 0.0
      %1234 = vmatprep.subr.mxu0 0.0
      %1235 = vmatpush1.msra.mxu0 0.0
      %1236 = vmatprep.subr.mxu0 0.0
      %1237 = vmatpush1.msra.mxu0 0.0
      %1238 = vmatprep.subr.mxu0 0.0
      %1239 = vmatpush1.msra.mxu0 0.0
      %1240 = vmatprep.subr.mxu0 0.0
      %1241 = vmatpush1.msra.mxu0 0.0
      %1242 = vmatprep.subr.mxu0 0.0
      %1243 = vmatpush1.msra.mxu0 0.0
      %1244 = vmatprep.subr.mxu0 0.0
      %1245 = vmatpush1.msra.mxu0 0.0
      %1246 = vmatprep.subr.mxu0 0.0
      %1247 = vmatpush1.msra.mxu0 0.0
      %1248 = vmatprep.subr.mxu0 0.0
      %1249 = vmatpush1.msra.mxu0 0.0
      %1250 = vmatprep.subr.mxu0 0.0
      %1251 = vmatpush1.msra.mxu0 0.0
      %1252 = vmatprep.subr.mxu0 0.0
      %1253 = vmatpush1.msra.mxu0 0.0
      %1254 = vmatprep.subr.mxu0 0.0
      %1255 = vmatpush1.msra.mxu0 0.0
      %1256 = vmatprep.mubr.f32.mxu0 0.0
      %1257 = vmatmul.mubr.f32.gmra.mrb[0].mxu0 %v1190
      %v1258 = vpop.f32.mrb[0].mxu0
      %v1259 = vadd.f32 %v1181, %v1258
      %v1260 = vpop.f32.mrb[0].mxu0
      %v1261 = vadd.f32 %v1185, %v1260
      %1262 = vdwg.mxu0
      %v1263 = vlaneseq
      %v1264 = vshrl.u32 %v1263, 7
      %v1265 = vsub.s32 0, %v1264
      %v1266 = vrot.slane %v1259, %v1265
      %v1267 = vmul.f32 %v1266, %v1166
      %v1268 = vmul.f32 %v1266, %v1167
      %v1269 = vlaneseq
      %v1270 = vshrl.u32 %v1269, 7
      %v1271 = vsub.s32 0, %v1270
      %v1272 = vrot.slane %v1261, %v1271
      %v1273 = vadd.f32 %v1267, %v1272
      %v1274 = vadd.f32 %v1268, %v1272
      %v1275 = vxor.u32 %v1273, 2147483648
      %v1276 = vxor.u32 %v1274, 2147483648
      %v1277 = vmul.f32 %v1275, 1.442695
      %v1278 = vpow.pop %v1277
      %v1279 = vmul.f32 %v1276, 1.442695
      %v1280 = vpow.pop %v1279
      %v1281 = vadd.f32 %v1278, 1.0
      %v1282 = vadd.f32 %v1280, 1.0
      %v1283 = vrcp.pop %v1281
      %v1284 = vmul.f32 1.0, %v1283
      %v1285 = vrcp.pop %v1282
      %v1286 = vmul.f32 1.0, %v1285
      %v1287 = vmul.f32 %v1273, %v1284
      %v1288 = vmul.f32 %v1274, %v1286
      %v1289 = vpack.c.bf16 %v1288, %v1287
      %v1291 = vshrl.u32 %v1289, 16
      %v1293 = vrot.slane %v1291, 7
      %v1294 = vshll.u32 %v1289, 16
      %v1296 = vor.u32 %v1293, %v1294
      %v1298 = vsel %vm657, 0, %v1296
      %v1299 = vrot.slane %v1294, 1
      %v1300 = vor.u32 %v1291, %v1299
      %v1302 = vsel %vm664, %v1300, 0
      %v1303 = vld [vmem:[%s8] sm:$0xf]
      %v1304 = vld [vmem:[%s8 + $0x4] sm:$0xf]
      %v1305 = vld [vmem:[%s8 + $0x8] sm:$0xf]
      %v1306 = vld [vmem:[%s8 + $0xc] sm:$0xf]
      %v1307 = vld [vmem:[%s8 + $0x10] sm:$0xf]
      %v1308 = vld [vmem:[%s8 + $0x14] sm:$0xf]
      %v1309 = vld [vmem:[%s8 + $0x18] sm:$0xf]
      %v1310 = vld [vmem:[%s8 + $0x1c] sm:$0xf]
      %v1311 = vld [vmem:[%s8 + $0x20] sm:$0xf]
      %v1312 = vld [vmem:[%s8 + $0x24] sm:$0xf]
      %v1313 = vld [vmem:[%s8 + $0x28] sm:$0xf]
      %v1314 = vld [vmem:[%s8 + $0x2c] sm:$0xf]
      %v1315 = vld [vmem:[%s8 + $0x30] sm:$0xf]
      %v1316 = vld [vmem:[%s8 + $0x34] sm:$0xf]
      %v1317 = vld [vmem:[%s8 + $0x38] sm:$0xf]
      %v1318 = vld [vmem:[%s8 + $0x3c] sm:$0xf]
      %v1319 = vld [vmem:[%s8 + $0x40] sm:$0xf]
      %v1320 = vld [vmem:[%s8 + $0x44] sm:$0xf]
      %v1321 = vld [vmem:[%s8 + $0x48] sm:$0xf]
      %v1322 = vld [vmem:[%s8 + $0x4c] sm:$0xf]
      %v1323 = vld [vmem:[%s8 + $0x50] sm:$0xf]
      %v1324 = vld [vmem:[%s8 + $0x54] sm:$0xf]
      %v1325 = vld [vmem:[%s8 + $0x58] sm:$0xf]
      %v1326 = vld [vmem:[%s8 + $0x5c] sm:$0xf]
      %v1327 = vld [vmem:[%s8 + $0x60] sm:$0xf]
      %v1328 = vld [vmem:[%s8 + $0x64] sm:$0xf]
      %v1329 = vld [vmem:[%s8 + $0x68] sm:$0xf]
      %v1330 = vld [vmem:[%s8 + $0x6c] sm:$0xf]
      %v1331 = vld [vmem:[%s8 + $0x70] sm:$0xf]
      %v1332 = vld [vmem:[%s8 + $0x74] sm:$0xf]
      %v1333 = vld [vmem:[%s8 + $0x78] sm:$0xf]
      %v1334 = vld [vmem:[%s8 + $0x7c] sm:$0xf]
      %v1335 = vld [vmem:[%s8 + $0x80] sm:$0xf]
      %v1336 = vld [vmem:[%s8 + $0x84] sm:$0xf]
      %v1337 = vld [vmem:[%s8 + $0x88] sm:$0xf]
      %v1338 = vld [vmem:[%s8 + $0x8c] sm:$0xf]
      %v1339 = vld [vmem:[%s8 + $0x90] sm:$0xf]
      %v1340 = vld [vmem:[%s8 + $0x94] sm:$0xf]
      %v1341 = vld [vmem:[%s8 + $0x98] sm:$0xf]
      %v1342 = vld [vmem:[%s8 + $0x9c] sm:$0xf]
      %v1343 = vld [vmem:[%s8 + $0xa0] sm:$0xf]
      %v1344 = vld [vmem:[%s8 + $0xa4] sm:$0xf]
      %v1345 = vld [vmem:[%s8 + $0xa8] sm:$0xf]
      %v1346 = vld [vmem:[%s8 + $0xac] sm:$0xf]
      %v1347 = vld [vmem:[%s8 + $0xb0] sm:$0xf]
      %v1348 = vld [vmem:[%s8 + $0xb4] sm:$0xf]
      %v1349 = vld [vmem:[%s8 + $0xb8] sm:$0xf]
      %v1350 = vld [vmem:[%s8 + $0xbc] sm:$0xf]
      %v1351 = vld [vmem:[%s9] sm:$0x1]
      %v1353 = vlaneseq
      %v1354 = vshrl.u32 %v1353, 7
      %v1355 = vsub.s32 0, %v1354
      %v1356 = vrot.slane %v1351, %v1355
      %v1406 = vunpack.c.l.b16 %v1303
      %v1407 = vunpack.c.l.b16 %v1304
      %v1408 = vunpack.c.l.b16 %v1305
      %v1409 = vunpack.c.l.b16 %v1306
      %v1410 = vunpack.c.l.b16 %v1307
      %v1411 = vunpack.c.l.b16 %v1308
      %v1412 = vunpack.c.l.b16 %v1309
      %v1413 = vunpack.c.l.b16 %v1310
      %v1414 = vunpack.c.l.b16 %v1311
      %v1415 = vunpack.c.l.b16 %v1312
      %v1416 = vunpack.c.l.b16 %v1313
      %v1417 = vunpack.c.l.b16 %v1314
      %v1418 = vunpack.c.l.b16 %v1315
      %v1419 = vunpack.c.l.b16 %v1316
      %v1420 = vunpack.c.l.b16 %v1317
      %v1421 = vunpack.c.l.b16 %v1318
      %v1422 = vunpack.c.l.b16 %v1319
      %v1423 = vunpack.c.l.b16 %v1320
      %v1424 = vunpack.c.l.b16 %v1321
      %v1425 = vunpack.c.l.b16 %v1322
      %v1426 = vunpack.c.l.b16 %v1323
      %v1427 = vunpack.c.l.b16 %v1324
      %v1428 = vunpack.c.l.b16 %v1325
      %v1429 = vunpack.c.l.b16 %v1326
      %v1430 = vunpack.c.l.b16 %v1327
      %v1431 = vunpack.c.l.b16 %v1328
      %v1432 = vunpack.c.l.b16 %v1329
      %v1433 = vunpack.c.l.b16 %v1330
      %v1434 = vunpack.c.l.b16 %v1331
      %v1435 = vunpack.c.l.b16 %v1332
      %v1436 = vunpack.c.l.b16 %v1333
      %v1437 = vunpack.c.l.b16 %v1334
      %v1438 = vunpack.c.l.b16 %v1335
      %v1439 = vunpack.c.l.b16 %v1336
      %v1440 = vunpack.c.l.b16 %v1337
      %v1441 = vunpack.c.l.b16 %v1338
      %v1442 = vunpack.c.l.b16 %v1339
      %v1443 = vunpack.c.l.b16 %v1340
      %v1444 = vunpack.c.l.b16 %v1341
      %v1445 = vunpack.c.l.b16 %v1342
      %v1446 = vunpack.c.l.b16 %v1343
      %v1447 = vunpack.c.l.b16 %v1344
      %v1448 = vunpack.c.l.b16 %v1345
      %v1449 = vunpack.c.l.b16 %v1346
      %v1450 = vunpack.c.l.b16 %v1347
      %v1451 = vunpack.c.l.b16 %v1348
      %v1452 = vunpack.c.l.b16 %v1349
      %v1453 = vunpack.c.l.b16 %v1350
      %v1454 = vpack.c.b16 %v1407, %v1406
      %v1455 = vpack.c.b16 %v1409, %v1408
      %v1456 = vpack.c.b16 %v1411, %v1410
      %v1457 = vpack.c.b16 %v1413, %v1412
      %v1458 = vpack.c.b16 %v1415, %v1414
      %v1459 = vpack.c.b16 %v1417, %v1416
      %v1460 = vpack.c.b16 %v1419, %v1418
      %v1461 = vpack.c.b16 %v1421, %v1420
      %v1462 = vpack.c.b16 %v1423, %v1422
      %v1463 = vpack.c.b16 %v1425, %v1424
      %v1464 = vpack.c.b16 %v1427, %v1426
      %v1465 = vpack.c.b16 %v1429, %v1428
      %v1466 = vpack.c.b16 %v1431, %v1430
      %v1467 = vpack.c.b16 %v1433, %v1432
      %v1468 = vpack.c.b16 %v1435, %v1434
      %v1469 = vpack.c.b16 %v1437, %v1436
      %v1470 = vpack.c.b16 %v1439, %v1438
      %v1471 = vpack.c.b16 %v1441, %v1440
      %v1472 = vpack.c.b16 %v1443, %v1442
      %v1473 = vpack.c.b16 %v1445, %v1444
      %v1474 = vpack.c.b16 %v1447, %v1446
      %v1475 = vpack.c.b16 %v1449, %v1448
      %v1476 = vpack.c.b16 %v1451, %v1450
      %v1477 = vpack.c.b16 %v1453, %v1452
      %1502 = vmatprep.subr.bf16.mxu0 0
      %1503 = vmatpush1.bf16.msra.mxu0 %v1454
      %1504 = vmatprep.subr.bf16.mxu0 0
      %1505 = vmatpush1.bf16.msra.mxu0 %v1455
      %1506 = vmatprep.subr.bf16.mxu0 0
      %1507 = vmatpush1.bf16.msra.mxu0 %v1456
      %1508 = vmatprep.subr.bf16.mxu0 0
      %1509 = vmatpush1.bf16.msra.mxu0 %v1457
      %1510 = vmatprep.subr.bf16.mxu0 0
      %1511 = vmatpush1.bf16.msra.mxu0 %v1458
      %1512 = vmatprep.subr.bf16.mxu0 0
      %1513 = vmatpush1.bf16.msra.mxu0 %v1459
      %1514 = vmatprep.subr.bf16.mxu0 0
      %1515 = vmatpush1.bf16.msra.mxu0 %v1460
      %1516 = vmatprep.subr.bf16.mxu0 0
      %1517 = vmatpush1.bf16.msra.mxu0 %v1461
      %1518 = vmatprep.subr.bf16.mxu0 0
      %1519 = vmatpush1.bf16.msra.mxu0 %v1462
      %1520 = vmatprep.subr.bf16.mxu0 0
      %1521 = vmatpush1.bf16.msra.mxu0 %v1463
      %1522 = vmatprep.subr.bf16.mxu0 0
      %1523 = vmatpush1.bf16.msra.mxu0 %v1464
      %1524 = vmatprep.subr.bf16.mxu0 0
      %1525 = vmatpush1.bf16.msra.mxu0 %v1465
      %1526 = vmatprep.subr.bf16.mxu0 0
      %1527 = vmatpush1.bf16.msra.mxu0 %v1466
      %1528 = vmatprep.subr.bf16.mxu0 0
      %1529 = vmatpush1.bf16.msra.mxu0 %v1467
      %1530 = vmatprep.subr.bf16.mxu0 0
      %1531 = vmatpush1.bf16.msra.mxu0 %v1468
      %1532 = vmatprep.subr.bf16.mxu0 0
      %1533 = vmatpush1.bf16.msra.mxu0 %v1469
      %1534 = vmatprep.mubr.bf16.mxu0 %v1289
      %1535 = vmatmul.mubr.bf16.gmra.mrb[0].mxu0 %v1298
      %v1536 = vpop.f32.mrb[0].mxu0
      %v1537 = vadd.f32 %v1356, %v1536
      %v1538 = vpop.f32.mrb[0].mxu0
      %v1539 = vpop.f32.mrb[0].mxu0
      %v1540 = vadd.f32 %v1356, %v1539
      %v1541 = vpop.f32.mrb[0].mxu0
      %1542 = vdwg.mxu0
      %1543 = vmatprep.subr.bf16.mxu0 0
      %1544 = vmatpush1.bf16.msra.mxu0 %v1470
      %1545 = vmatprep.subr.bf16.mxu0 0
      %1546 = vmatpush1.bf16.msra.mxu0 %v1471
      %1547 = vmatprep.subr.bf16.mxu0 0
      %1548 = vmatpush1.bf16.msra.mxu0 %v1472
      %1549 = vmatprep.subr.bf16.mxu0 0
      %1550 = vmatpush1.bf16.msra.mxu0 %v1473
      %1551 = vmatprep.subr.bf16.mxu0 0
      %1552 = vmatpush1.bf16.msra.mxu0 %v1474
      %1553 = vmatprep.subr.bf16.mxu0 0
      %1554 = vmatpush1.bf16.msra.mxu0 %v1475
      %1555 = vmatprep.subr.bf16.mxu0 0
      %1556 = vmatpush1.bf16.msra.mxu0 %v1476
      %1557 = vmatprep.subr.bf16.mxu0 0
      %1558 = vmatpush1.bf16.msra.mxu0 %v1477
      %1559 = vmatprep.subr.bf16.mxu0 0
      %1560 = vmatpush1.bf16.msra.mxu0 0
      %1561 = vmatprep.subr.bf16.mxu0 0
      %1562 = vmatpush1.bf16.msra.mxu0 0
      %1563 = vmatprep.subr.bf16.mxu0 0
      %1564 = vmatpush1.bf16.msra.mxu0 0
      %1565 = vmatprep.subr.bf16.mxu0 0
      %1566 = vmatpush1.bf16.msra.mxu0 0
      %1567 = vmatprep.subr.bf16.mxu0 0
      %1568 = vmatpush1.bf16.msra.mxu0 0
      %1569 = vmatprep.subr.bf16.mxu0 0
      %1570 = vmatpush1.bf16.msra.mxu0 0
      %1571 = vmatprep.subr.bf16.mxu0 0
      %1572 = vmatpush1.bf16.msra.mxu0 0
      %1573 = vmatprep.subr.bf16.mxu0 0
      %1574 = vmatpush1.bf16.msra.mxu0 0
      %1575 = vmatprep.mubr.bf16.mxu0 0
      %1576 = vmatmul.mubr.bf16.gmra.mrb[0].mxu0 %v1302
      %v1577 = vpop.f32.mrb[0].mxu0
      %v1578 = vadd.f32 %v1537, %v1577
      %v1579 = vpop.f32.mrb[0].mxu0
      %v1580 = vpop.f32.mrb[0].mxu0
      %v1581 = vadd.f32 %v1540, %v1580
      %v1582 = vpop.f32.mrb[0].mxu0
      %1583 = vdwg.mxu0
      %v1584 = vld [vmem:[%s12] sm:$0x1]
      %v1585 = vld [vmem:[%s13] sm:$0x1]
      %v1586 = vadd.f32 %v1578, %v1581
      %v1587 = vrot.slane %v1586, 4
      %v1588 = vadd.f32 %v1586, %v1587
      %v1589 = vrot.slane %v1588, 2
      %v1590 = vadd.f32 %v1588, %v1589
      %v1591 = vrot.slane %v1590, 1
      %v1592 = vadd.f32 %v1590, %v1591
      %v1593 = vmul.f32 %v1578, %v1578
      %v1594 = vmul.f32 %v1581, %v1581
      %v1595 = vadd.f32 %v1593, %v1594
      %v1596 = vrot.slane %v1595, 4
      %v1597 = vadd.f32 %v1595, %v1596
      %v1598 = vrot.slane %v1597, 2
      %v1599 = vadd.f32 %v1597, %v1598
      %v1600 = vrot.slane %v1599, 1
      %v1601 = vadd.f32 %v1599, %v1600
      %v1602 = vsel %vm965, %v1592, %v1601
      %1603 = vmatprep.subr.mxu0 0.0
      %1604 = vmatpush1.msra.mxu0 %v967
      %1605 = vmatprep.subr.mxu0 0.0
      %1606 = vmatpush1.msra.mxu0 %v968
      %1607 = vmatprep.subr.mxu0 0.0
      %1608 = vmatpush1.msra.mxu0 %v969
      %1609 = vmatprep.subr.mxu0 0.0
      %1610 = vmatpush1.msra.mxu0 %v970
      %1611 = vmatprep.subr.mxu0 0.0
      %1612 = vmatpush1.msra.mxu0 %v971
      %1613 = vmatprep.subr.mxu0 0.0
      %1614 = vmatpush1.msra.mxu0 %v972
      %1615 = vmatprep.subr.mxu0 0.0
      %1616 = vmatpush1.msra.mxu0 %v973
      %1617 = vmatprep.subr.mxu0 0.0
      %1618 = vmatpush1.msra.mxu0 %v974
      %1619 = vmatprep.subr.mxu0 0.0
      %1620 = vmatpush1.msra.mxu0 %v975
      %1621 = vmatprep.subr.mxu0 0.0
      %1622 = vmatpush1.msra.mxu0 %v976
      %1623 = vmatprep.subr.mxu0 0.0
      %1624 = vmatpush1.msra.mxu0 %v977
      %1625 = vmatprep.subr.mxu0 0.0
      %1626 = vmatpush1.msra.mxu0 %v978
      %1627 = vmatprep.subr.mxu0 0.0
      %1628 = vmatpush1.msra.mxu0 %v979
      %1629 = vmatprep.subr.mxu0 0.0
      %1630 = vmatpush1.msra.mxu0 %v980
      %1631 = vmatprep.subr.mxu0 0.0
      %1632 = vmatpush1.msra.mxu0 %v981
      %1633 = vmatprep.subr.mxu0 0.0
      %1634 = vmatpush1.msra.mxu0 %v982
      %1635 = vmatprep.subr.mxu0 0.0
      %1636 = vmatpush1.msra.mxu0 0.0
      %1637 = vmatprep.subr.mxu0 0.0
      %1638 = vmatpush1.msra.mxu0 0.0
      %1639 = vmatprep.subr.mxu0 0.0
      %1640 = vmatpush1.msra.mxu0 0.0
      %1641 = vmatprep.subr.mxu0 0.0
      %1642 = vmatpush1.msra.mxu0 0.0
      %1643 = vmatprep.subr.mxu0 0.0
      %1644 = vmatpush1.msra.mxu0 0.0
      %1645 = vmatprep.subr.mxu0 0.0
      %1646 = vmatpush1.msra.mxu0 0.0
      %1647 = vmatprep.subr.mxu0 0.0
      %1648 = vmatpush1.msra.mxu0 0.0
      %1649 = vmatprep.subr.mxu0 0.0
      %1650 = vmatpush1.msra.mxu0 0.0
      %1651 = vmatprep.subr.mxu0 0.0
      %1652 = vmatpush1.msra.mxu0 0.0
      %1653 = vmatprep.subr.mxu0 0.0
      %1654 = vmatpush1.msra.mxu0 0.0
      %1655 = vmatprep.subr.mxu0 0.0
      %1656 = vmatpush1.msra.mxu0 0.0
      %1657 = vmatprep.subr.mxu0 0.0
      %1658 = vmatpush1.msra.mxu0 0.0
      %1659 = vmatprep.subr.mxu0 0.0
      %1660 = vmatpush1.msra.mxu0 0.0
      %1661 = vmatprep.subr.mxu0 0.0
      %1662 = vmatpush1.msra.mxu0 0.0
      %1663 = vmatprep.subr.mxu0 0.0
      %1664 = vmatpush1.msra.mxu0 0.0
      %1665 = vmatprep.subr.mxu0 0.0
      %1666 = vmatpush1.msra.mxu0 0.0
      %1667 = vmatprep.mubr.f32.mxu0 0.0
      %1668 = vmatmul.mubr.f32.gmra.mrb[0].mxu0 %v1602
      %v1669 = vpop.f32.mrb[0].mxu0
      %v1670 = vadd.f32 0.0, %v1669
      %v1671 = vpop.f32.mrb[0].mxu0
      %1672 = vdwg.mxu0
      %v1673 = vmul.f32 %v1670, 0.0009765625
      %v1675 = vsel %vm1055, %v1673, 0
      %1677 = vmatprep.subr.mxu0 0.0
      %1678 = vmatpush1.msra.mxu0 %v1061
      %1679 = vmatprep.subr.mxu0 0.0
      %1680 = vmatpush1.msra.mxu0 0.0
      %1681 = vmatprep.subr.mxu0 0.0
      %1682 = vmatpush1.msra.mxu0 0.0
      %1683 = vmatprep.subr.mxu0 0.0
      %1684 = vmatpush1.msra.mxu0 0.0
      %1685 = vmatprep.subr.mxu0 0.0
      %1686 = vmatpush1.msra.mxu0 0.0
      %1687 = vmatprep.subr.mxu0 0.0
      %1688 = vmatpush1.msra.mxu0 0.0
      %1689 = vmatprep.subr.mxu0 0.0
      %1690 = vmatpush1.msra.mxu0 0.0
      %1691 = vmatprep.subr.mxu0 0.0
      %1692 = vmatpush1.msra.mxu0 0.0
      %1693 = vmatprep.subr.mxu0 0.0
      %1694 = vmatpush1.msra.mxu0 0.0
      %1695 = vmatprep.subr.mxu0 0.0
      %1696 = vmatpush1.msra.mxu0 0.0
      %1697 = vmatprep.subr.mxu0 0.0
      %1698 = vmatpush1.msra.mxu0 0.0
      %1699 = vmatprep.subr.mxu0 0.0
      %1700 = vmatpush1.msra.mxu0 0.0
      %1701 = vmatprep.subr.mxu0 0.0
      %1702 = vmatpush1.msra.mxu0 0.0
      %1703 = vmatprep.subr.mxu0 0.0
      %1704 = vmatpush1.msra.mxu0 0.0
      %1705 = vmatprep.subr.mxu0 0.0
      %1706 = vmatpush1.msra.mxu0 0.0
      %1707 = vmatprep.subr.mxu0 0.0
      %1708 = vmatpush1.msra.mxu0 0.0
      %1709 = vmatprep.subr.mxu0 0.0
      %1710 = vmatpush1.msra.mxu0 0.0
      %1711 = vmatprep.subr.mxu0 0.0
      %1712 = vmatpush1.msra.mxu0 0.0
      %1713 = vmatprep.subr.mxu0 0.0
      %1714 = vmatpush1.msra.mxu0 0.0
      %1715 = vmatprep.subr.mxu0 0.0
      %1716 = vmatpush1.msra.mxu0 0.0
      %1717 = vmatprep.subr.mxu0 0.0
      %1718 = vmatpush1.msra.mxu0 0.0
      %1719 = vmatprep.subr.mxu0 0.0
      %1720 = vmatpush1.msra.mxu0 0.0
      %1721 = vmatprep.subr.mxu0 0.0
      %1722 = vmatpush1.msra.mxu0 0.0
      %1723 = vmatprep.subr.mxu0 0.0
      %1724 = vmatpush1.msra.mxu0 0.0
      %1725 = vmatprep.subr.mxu0 0.0
      %1726 = vmatpush1.msra.mxu0 0.0
      %1727 = vmatprep.subr.mxu0 0.0
      %1728 = vmatpush1.msra.mxu0 0.0
      %1729 = vmatprep.subr.mxu0 0.0
      %1730 = vmatpush1.msra.mxu0 0.0
      %1731 = vmatprep.subr.mxu0 0.0
      %1732 = vmatpush1.msra.mxu0 0.0
      %1733 = vmatprep.subr.mxu0 0.0
      %1734 = vmatpush1.msra.mxu0 0.0
      %1735 = vmatprep.subr.mxu0 0.0
      %1736 = vmatpush1.msra.mxu0 0.0
      %1737 = vmatprep.subr.mxu0 0.0
      %1738 = vmatpush1.msra.mxu0 0.0
      %1739 = vmatprep.subr.mxu0 0.0
      %1740 = vmatpush1.msra.mxu0 0.0
      %1741 = vmatprep.mubr.f32.mxu0 0.0
      %1742 = vmatmul.mubr.f32.gmra.mrb[0].mxu0 %v1675
      %v1743 = vpop.f32.mrb[0].mxu0
      %v1744 = vadd.f32 0.0, %v1743
      %v1745 = vpop.f32.mrb[0].mxu0
      %1746 = vdwg.mxu0
      %v1747 = vmul.f32 %v1744, %v1744
      %v1749 = vrot.slane %v1747, 7
      %v1751 = vsub.f32 %v1744, %v1749
      %v1752 = vlaneseq
      %v1753 = vshrl.u32 %v1752, 7
      %v1754 = vsub.s32 0, %v1753
      %v1755 = vrot.slane %v1744, %v1754
      %v1756 = vsub.f32 %v1578, %v1755
      %v1757 = vsub.f32 %v1581, %v1755
      %v1758 = vadd.f32 %v1751, 1e-05
      %v1759 = vrsqrt.pop %v1758
      %v1760 = vlaneseq
      %v1761 = vshrl.u32 %v1760, 7
      %v1762 = vsub.s32 1, %v1761
      %v1763 = vrot.slane %v1759, %v1762
      %v1764 = vmul.f32 %v1756, %v1763
      %v1765 = vmul.f32 %v1757, %v1763
      %v1767 = vlaneseq
      %v1768 = vshrl.u32 %v1767, 7
      %v1769 = vsub.s32 0, %v1768
      %v1770 = vrot.slane %v1584, %v1769
      %v1772 = vmul.f32 %v1764, %v1770
      %v1773 = vmul.f32 %v1765, %v1770
      %v1775 = vlaneseq
      %v1776 = vshrl.u32 %v1775, 7
      %v1777 = vsub.s32 0, %v1776
      %v1778 = vrot.slane %v1585, %v1777
      %v1780 = vadd.f32 %v1772, %v1778
      %v1781 = vadd.f32 %v1773, %v1778
      %v1782 = vld [vmem:[%s10] sm:$0xff]
      %v1783 = vld [vmem:[%s10 + $0x8] sm:$0xff]
      %v1784 = vld [vmem:[%s10 + $0x10] sm:$0xff]
      %v1785 = vld [vmem:[%s10 + $0x18] sm:$0xff]
      %v1786 = vld [vmem:[%s10 + $0x20] sm:$0xff]
      %v1787 = vld [vmem:[%s10 + $0x28] sm:$0xff]
      %v1788 = vld [vmem:[%s10 + $0x30] sm:$0xff]
      %v1789 = vld [vmem:[%s10 + $0x38] sm:$0xff]
      %v1790 = vld [vmem:[%s11] sm:$0x3]
      %v1792 = vlaneseq
      %v1793 = vshrl.u32 %v1792, 7
      %v1794 = vsub.s32 0, %v1793
      %v1795 = vrot.slane %v1790, %v1794
      %v1796 = vlaneseq
      %v1797 = vshrl.u32 %v1796, 7
      %v1798 = vsub.s32 1, %v1797
      %v1799 = vrot.slane %v1790, %v1798
      %1802 = vmatprep.subr.mxu0 %v1783
      %1803 = vmatpush1.msra.mxu0 %v1782
      %1804 = vmatprep.subr.mxu0 %v1785
      %1805 = vmatpush1.msra.mxu0 %v1784
      %1806 = vmatprep.subr.mxu0 %v1787
      %1807 = vmatpush1.msra.mxu0 %v1786
      %1808 = vmatprep.subr.mxu0 %v1789
      %1809 = vmatpush1.msra.mxu0 %v1788
      %1810 = vmatprep.subr.mxu0 0.0
      %1811 = vmatpush1.msra.mxu0 0.0
      %1812 = vmatprep.subr.mxu0 0.0
      %1813 = vmatpush1.msra.mxu0 0.0
      %1814 = vmatprep.subr.mxu0 0.0
      %1815 = vmatpush1.msra.mxu0 0.0
      %1816 = vmatprep.subr.mxu0 0.0
      %1817 = vmatpush1.msra.mxu0 0.0
      %1818 = vmatprep.subr.mxu0 0.0
      %1819 = vmatpush1.msra.mxu0 0.0
      %1820 = vmatprep.subr.mxu0 0.0
      %1821 = vmatpush1.msra.mxu0 0.0
      %1822 = vmatprep.subr.mxu0 0.0
      %1823 = vmatpush1.msra.mxu0 0.0
      %1824 = vmatprep.subr.mxu0 0.0
      %1825 = vmatpush1.msra.mxu0 0.0
      %1826 = vmatprep.subr.mxu0 0.0
      %1827 = vmatpush1.msra.mxu0 0.0
      %1828 = vmatprep.subr.mxu0 0.0
      %1829 = vmatpush1.msra.mxu0 0.0
      %1830 = vmatprep.subr.mxu0 0.0
      %1831 = vmatpush1.msra.mxu0 0.0
      %1832 = vmatprep.subr.mxu0 0.0
      %1833 = vmatpush1.msra.mxu0 0.0
      %1834 = vmatprep.subr.mxu0 0.0
      %1835 = vmatpush1.msra.mxu0 0.0
      %1836 = vmatprep.subr.mxu0 0.0
      %1837 = vmatpush1.msra.mxu0 0.0
      %1838 = vmatprep.subr.mxu0 0.0
      %1839 = vmatpush1.msra.mxu0 0.0
      %1840 = vmatprep.subr.mxu0 0.0
      %1841 = vmatpush1.msra.mxu0 0.0
      %1842 = vmatprep.subr.mxu0 0.0
      %1843 = vmatpush1.msra.mxu0 0.0
      %1844 = vmatprep.subr.mxu0 0.0
      %1845 = vmatpush1.msra.mxu0 0.0
      %1846 = vmatprep.subr.mxu0 0.0
      %1847 = vmatpush1.msra.mxu0 0.0
      %1848 = vmatprep.subr.mxu0 0.0
      %1849 = vmatpush1.msra.mxu0 0.0
      %1850 = vmatprep.subr.mxu0 0.0
      %1851 = vmatpush1.msra.mxu0 0.0
      %1852 = vmatprep.subr.mxu0 0.0
      %1853 = vmatpush1.msra.mxu0 0.0
      %1854 = vmatprep.subr.mxu0 0.0
      %1855 = vmatpush1.msra.mxu0 0.0
      %1856 = vmatprep.subr.mxu0 0.0
      %1857 = vmatpush1.msra.mxu0 0.0
      %1858 = vmatprep.subr.mxu0 0.0
      %1859 = vmatpush1.msra.mxu0 0.0
      %1860 = vmatprep.subr.mxu0 0.0
      %1861 = vmatpush1.msra.mxu0 0.0
      %1862 = vmatprep.subr.mxu0 0.0
      %1863 = vmatpush1.msra.mxu0 0.0
      %1864 = vmatprep.subr.mxu0 0.0
      %1865 = vmatpush1.msra.mxu0 0.0
      %1866 = vmatprep.mubr.f32.mxu0 0.0
      %1867 = vmatmul.mubr.f32.gmra.mrb[0].mxu0 %v1190
      %v1868 = vpop.f32.mrb[0].mxu0
      %v1869 = vadd.f32 %v1795, %v1868
      %v1870 = vpop.f32.mrb[0].mxu0
      %v1871 = vadd.f32 %v1799, %v1870
      %1872 = vdwg.mxu0
      %v1873 = vlaneseq
      %v1874 = vshrl.u32 %v1873, 7
      %v1875 = vsub.s32 0, %v1874
      %v1876 = vrot.slane %v1869, %v1875
      %v1877 = vmul.f32 %v1876, %v1780
      %v1878 = vmul.f32 %v1876, %v1781
      %v1879 = vlaneseq
      %v1880 = vshrl.u32 %v1879, 7
      %v1881 = vsub.s32 0, %v1880
      %v1882 = vrot.slane %v1871, %v1881
      %v1883 = vadd.f32 %v1877, %v1882
      %v1884 = vadd.f32 %v1878, %v1882
      %v1885 = vxor.u32 %v1883, 2147483648
      %v1886 = vxor.u32 %v1884, 2147483648
      %v1887 = vmul.f32 %v1885, 1.442695
      %v1888 = vpow.pop %v1887
      %v1889 = vmul.f32 %v1886, 1.442695
      %v1890 = vpow.pop %v1889
      %v1891 = vadd.f32 %v1888, 1.0
      %v1892 = vadd.f32 %v1890, 1.0
      %v1893 = vrcp.pop %v1891
      %v1894 = vmul.f32 1.0, %v1893
      %v1895 = vrcp.pop %v1892
      %v1896 = vmul.f32 1.0, %v1895
      %v1897 = vmul.f32 %v1883, %v1894
      %v1898 = vmul.f32 %v1884, %v1896
      %v1899 = vadd.f32 %v643, %v1897
      %v1900 = vadd.f32 %v644, %v1898
      %v1901 = vpack.c.bf16 %v1900, %v1899
      %v1903 = vshrl.u32 %v1901, 16
      %v1905 = vrot.slane %v1903, 7
      %v1906 = vshll.u32 %v1901, 16
      %v1908 = vor.u32 %v1905, %v1906
      %v1910 = vsel %vm657, 0, %v1908
      %v1911 = vrot.slane %v1906, 1
      %v1912 = vor.u32 %v1903, %v1911
      %v1914 = vsel %vm664, %v1912, 0
      %v1915 = vld [vmem:[%s14] sm:$0xff]
      %v1916 = vld [vmem:[%s14 + $0x8] sm:$0xff]
      %v1917 = vld [vmem:[%s14 + $0x10] sm:$0xff]
      %v1918 = vld [vmem:[%s14 + $0x18] sm:$0xff]
      %v1919 = vld [vmem:[%s14 + $0x20] sm:$0xff]
      %v1920 = vld [vmem:[%s14 + $0x28] sm:$0xff]
      %v1921 = vld [vmem:[%s14 + $0x30] sm:$0xff]
      %v1922 = vld [vmem:[%s14 + $0x38] sm:$0xff]
      %v1923 = vld [vmem:[%s14 + $0x40] sm:$0xff]
      %v1924 = vld [vmem:[%s14 + $0x48] sm:$0xff]
      %v1925 = vld [vmem:[%s14 + $0x50] sm:$0xff]
      %v1926 = vld [vmem:[%s14 + $0x58] sm:$0xff]
      %v1927 = vld [vmem:[%s14 + $0x60] sm:$0xff]
      %v1928 = vld [vmem:[%s14 + $0x68] sm:$0xff]
      %v1929 = vld [vmem:[%s14 + $0x70] sm:$0xff]
      %v1930 = vld [vmem:[%s14 + $0x78] sm:$0xff]
      %v1931 = vld [vmem:[%s14 + $0x80] sm:$0xff]
      %v1932 = vld [vmem:[%s14 + $0x88] sm:$0xff]
      %v1933 = vld [vmem:[%s14 + $0x90] sm:$0xff]
      %v1934 = vld [vmem:[%s14 + $0x98] sm:$0xff]
      %v1935 = vld [vmem:[%s14 + $0xa0] sm:$0xff]
      %v1936 = vld [vmem:[%s14 + $0xa8] sm:$0xff]
      %v1937 = vld [vmem:[%s14 + $0xb0] sm:$0xff]
      %v1938 = vld [vmem:[%s14 + $0xb8] sm:$0xff]
      %v1939 = vld [vmem:[%s14 + $0xc0] sm:$0xff]
      %v1940 = vld [vmem:[%s14 + $0xc8] sm:$0xff]
      %v1941 = vld [vmem:[%s14 + $0xd0] sm:$0xff]
      %v1942 = vld [vmem:[%s14 + $0xd8] sm:$0xff]
      %v1943 = vld [vmem:[%s14 + $0xe0] sm:$0xff]
      %v1944 = vld [vmem:[%s14 + $0xe8] sm:$0xff]
      %v1945 = vld [vmem:[%s14 + $0xf0] sm:$0xff]
      %v1946 = vld [vmem:[%s14 + $0xf8] sm:$0xff]
      %v1947 = vld [vmem:[%s14 + $0x100] sm:$0xff]
      %v1948 = vld [vmem:[%s14 + $0x108] sm:$0xff]
      %v1949 = vld [vmem:[%s14 + $0x110] sm:$0xff]
      %v1950 = vld [vmem:[%s14 + $0x118] sm:$0xff]
      %v1951 = vld [vmem:[%s14 + $0x120] sm:$0xff]
      %v1952 = vld [vmem:[%s14 + $0x128] sm:$0xff]
      %v1953 = vld [vmem:[%s14 + $0x130] sm:$0xff]
      %v1954 = vld [vmem:[%s14 + $0x138] sm:$0xff]
      %v1955 = vld [vmem:[%s14 + $0x140] sm:$0xff]
      %v1956 = vld [vmem:[%s14 + $0x148] sm:$0xff]
      %v1957 = vld [vmem:[%s14 + $0x150] sm:$0xff]
      %v1958 = vld [vmem:[%s14 + $0x158] sm:$0xff]
      %v1959 = vld [vmem:[%s14 + $0x160] sm:$0xff]
      %v1960 = vld [vmem:[%s14 + $0x168] sm:$0xff]
      %v1961 = vld [vmem:[%s14 + $0x170] sm:$0xff]
      %v1962 = vld [vmem:[%s14 + $0x178] sm:$0xff]
      %v1963 = vld [vmem:[%s15] sm:$0x3]
      %v1965 = vlaneseq
      %v1966 = vshrl.u32 %v1965, 7
      %v1967 = vsub.s32 0, %v1966
      %v1968 = vrot.slane %v1963, %v1967
      %v1969 = vlaneseq
      %v1970 = vshrl.u32 %v1969, 7
      %v1971 = vsub.s32 1, %v1970
      %v1972 = vrot.slane %v1963, %v1971
      %v2023 = vunpack.c.l.b16 %v1915
      %v2024 = vunpack.c.h.b16 %v1915
      %v2025 = vunpack.c.l.b16 %v1916
      %v2026 = vunpack.c.h.b16 %v1916
      %v2027 = vunpack.c.l.b16 %v1917
      %v2028 = vunpack.c.h.b16 %v1917
      %v2029 = vunpack.c.l.b16 %v1918
      %v2030 = vunpack.c.h.b16 %v1918
      %v2031 = vunpack.c.l.b16 %v1919
      %v2032 = vunpack.c.h.b16 %v1919
      %v2033 = vunpack.c.l.b16 %v1920
      %v2034 = vunpack.c.h.b16 %v1920
      %v2035 = vunpack.c.l.b16 %v1921
      %v2036 = vunpack.c.h.b16 %v1921
      %v2037 = vunpack.c.l.b16 %v1922
      %v2038 = vunpack.c.h.b16 %v1922
      %v2039 = vunpack.c.l.b16 %v1923
      %v2040 = vunpack.c.h.b16 %v1923
      %v2041 = vunpack.c.l.b16 %v1924
      %v2042 = vunpack.c.h.b16 %v1924
      %v2043 = vunpack.c.l.b16 %v1925
      %v2044 = vunpack.c.h.b16 %v1925
      %v2045 = vunpack.c.l.b16 %v1926
      %v2046 = vunpack.c.h.b16 %v1926
      %v2047 = vunpack.c.l.b16 %v1927
      %v2048 = vunpack.c.h.b16 %v1927
      %v2049 = vunpack.c.l.b16 %v1928
      %v2050 = vunpack.c.h.b16 %v1928
      %v2051 = vunpack.c.l.b16 %v1929
      %v2052 = vunpack.c.h.b16 %v1929
      %v2053 = vunpack.c.l.b16 %v1930
      %v2054 = vunpack.c.h.b16 %v1930
      %v2055 = vunpack.c.l.b16 %v1931
      %v2056 = vunpack.c.h.b16 %v1931
      %v2057 = vunpack.c.l.b16 %v1932
      %v2058 = vunpack.c.h.b16 %v1932
      %v2059 = vunpack.c.l.b16 %v1933
      %v2060 = vunpack.c.h.b16 %v1933
      %v2061 = vunpack.c.l.b16 %v1934
      %v2062 = vunpack.c.h.b16 %v1934
      %v2063 = vunpack.c.l.b16 %v1935
      %v2064 = vunpack.c.h.b16 %v1935
      %v2065 = vunpack.c.l.b16 %v1936
      %v2066 = vunpack.c.h.b16 %v1936
      %v2067 = vunpack.c.l.b16 %v1937
      %v2068 = vunpack.c.h.b16 %v1937
      %v2069 = vunpack.c.l.b16 %v1938
      %v2070 = vunpack.c.h.b16 %v1938
      %v2071 = vunpack.c.l.b16 %v1939
      %v2072 = vunpack.c.h.b16 %v1939
      %v2073 = vunpack.c.l.b16 %v1940
      %v2074 = vunpack.c.h.b16 %v1940
      %v2075 = vunpack.c.l.b16 %v1941
      %v2076 = vunpack.c.h.b16 %v1941
      %v2077 = vunpack.c.l.b16 %v1942
      %v2078 = vunpack.c.h.b16 %v1942
      %v2079 = vunpack.c.l.b16 %v1943
      %v2080 = vunpack.c.h.b16 %v1943
      %v2081 = vunpack.c.l.b16 %v1944
      %v2082 = vunpack.c.h.b16 %v1944
      %v2083 = vunpack.c.l.b16 %v1945
      %v2084 = vunpack.c.h.b16 %v1945
      %v2085 = vunpack.c.l.b16 %v1946
      %v2086 = vunpack.c.h.b16 %v1946
      %v2087 = vunpack.c.l.b16 %v1947
      %v2088 = vunpack.c.h.b16 %v1947
      %v2089 = vunpack.c.l.b16 %v1948
      %v2090 = vunpack.c.h.b16 %v1948
      %v2091 = vunpack.c.l.b16 %v1949
      %v2092 = vunpack.c.h.b16 %v1949
      %v2093 = vunpack.c.l.b16 %v1950
      %v2094 = vunpack.c.h.b16 %v1950
      %v2095 = vunpack.c.l.b16 %v1951
      %v2096 = vunpack.c.h.b16 %v1951
      %v2097 = vunpack.c.l.b16 %v1952
      %v2098 = vunpack.c.h.b16 %v1952
      %v2099 = vunpack.c.l.b16 %v1953
      %v2100 = vunpack.c.h.b16 %v1953
      %v2101 = vunpack.c.l.b16 %v1954
      %v2102 = vunpack.c.h.b16 %v1954
      %v2103 = vunpack.c.l.b16 %v1955
      %v2104 = vunpack.c.h.b16 %v1955
      %v2105 = vunpack.c.l.b16 %v1956
      %v2106 = vunpack.c.h.b16 %v1956
      %v2107 = vunpack.c.l.b16 %v1957
      %v2108 = vunpack.c.h.b16 %v1957
      %v2109 = vunpack.c.l.b16 %v1958
      %v2110 = vunpack.c.h.b16 %v1958
      %v2111 = vunpack.c.l.b16 %v1959
      %v2112 = vunpack.c.h.b16 %v1959
      %v2113 = vunpack.c.l.b16 %v1960
      %v2114 = vunpack.c.h.b16 %v1960
      %v2115 = vunpack.c.l.b16 %v1961
      %v2116 = vunpack.c.h.b16 %v1961
      %v2117 = vunpack.c.l.b16 %v1962
      %v2118 = vunpack.c.h.b16 %v1962
      %v2119 = vpack.c.b16 %v2025, %v2023
      %v2120 = vpack.c.b16 %v2026, %v2024
      %v2121 = vpack.c.b16 %v2029, %v2027
      %v2122 = vpack.c.b16 %v2030, %v2028
      %v2123 = vpack.c.b16 %v2033, %v2031
      %v2124 = vpack.c.b16 %v2034, %v2032
      %v2125 = vpack.c.b16 %v2037, %v2035
      %v2126 = vpack.c.b16 %v2038, %v2036
      %v2127 = vpack.c.b16 %v2041, %v2039
      %v2128 = vpack.c.b16 %v2042, %v2040
      %v2129 = vpack.c.b16 %v2045, %v2043
      %v2130 = vpack.c.b16 %v2046, %v2044
      %v2131 = vpack.c.b16 %v2049, %v2047
      %v2132 = vpack.c.b16 %v2050, %v2048
      %v2133 = vpack.c.b16 %v2053, %v2051
      %v2134 = vpack.c.b16 %v2054, %v2052
      %v2135 = vpack.c.b16 %v2057, %v2055
      %v2136 = vpack.c.b16 %v2058, %v2056
      %v2137 = vpack.c.b16 %v2061, %v2059
      %v2138 = vpack.c.b16 %v2062, %v2060
      %v2139 = vpack.c.b16 %v2065, %v2063
      %v2140 = vpack.c.b16 %v2066, %v2064
      %v2141 = vpack.c.b16 %v2069, %v2067
      %v2142 = vpack.c.b16 %v2070, %v2068
      %v2143 = vpack.c.b16 %v2073, %v2071
      %v2144 = vpack.c.b16 %v2074, %v2072
      %v2145 = vpack.c.b16 %v2077, %v2075
      %v2146 = vpack.c.b16 %v2078, %v2076
      %v2147 = vpack.c.b16 %v2081, %v2079
      %v2148 = vpack.c.b16 %v2082, %v2080
      %v2149 = vpack.c.b16 %v2085, %v2083
      %v2150 = vpack.c.b16 %v2086, %v2084
      %v2151 = vpack.c.b16 %v2089, %v2087
      %v2152 = vpack.c.b16 %v2090, %v2088
      %v2153 = vpack.c.b16 %v2093, %v2091
      %v2154 = vpack.c.b16 %v2094, %v2092
      %v2155 = vpack.c.b16 %v2097, %v2095
      %v2156 = vpack.c.b16 %v2098, %v2096
      %v2157 = vpack.c.b16 %v2101, %v2099
      %v2158 = vpack.c.b16 %v2102, %v2100
      %v2159 = vpack.c.b16 %v2105, %v2103
      %v2160 = vpack.c.b16 %v2106, %v2104
      %v2161 = vpack.c.b16 %v2109, %v2107
      %v2162 = vpack.c.b16 %v2110, %v2108
      %v2163 = vpack.c.b16 %v2113, %v2111
      %v2164 = vpack.c.b16 %v2114, %v2112
      %v2165 = vpack.c.b16 %v2117, %v2115
      %v2166 = vpack.c.b16 %v2118, %v2116
      %2215 = vmatprep.subr.bf16.mxu0 %v2120
      %2216 = vmatpush1.bf16.msra.mxu0 %v2119
      %2217 = vmatprep.subr.bf16.mxu0 %v2122
      %2218 = vmatpush1.bf16.msra.mxu0 %v2121
      %2219 = vmatprep.subr.bf16.mxu0 %v2124
      %2220 = vmatpush1.bf16.msra.mxu0 %v2123
      %2221 = vmatprep.subr.bf16.mxu0 %v2126
      %2222 = vmatpush1.bf16.msra.mxu0 %v2125
      %2223 = vmatprep.subr.bf16.mxu0 %v2128
      %2224 = vmatpush1.bf16.msra.mxu0 %v2127
      %2225 = vmatprep.subr.bf16.mxu0 %v2130
      %2226 = vmatpush1.bf16.msra.mxu0 %v2129
      %2227 = vmatprep.subr.bf16.mxu0 %v2132
      %2228 = vmatpush1.bf16.msra.mxu0 %v2131
      %2229 = vmatprep.subr.bf16.mxu0 %v2134
      %2230 = vmatpush1.bf16.msra.mxu0 %v2133
      %2231 = vmatprep.subr.bf16.mxu0 %v2136
      %2232 = vmatpush1.bf16.msra.mxu0 %v2135
      %2233 = vmatprep.subr.bf16.mxu0 %v2138
      %2234 = vmatpush1.bf16.msra.mxu0 %v2137
      %2235 = vmatprep.subr.bf16.mxu0 %v2140
      %2236 = vmatpush1.bf16.msra.mxu0 %v2139
      %2237 = vmatprep.subr.bf16.mxu0 %v2142
      %2238 = vmatpush1.bf16.msra.mxu0 %v2141
      %2239 = vmatprep.subr.bf16.mxu0 %v2144
      %2240 = vmatpush1.bf16.msra.mxu0 %v2143
      %2241 = vmatprep.subr.bf16.mxu0 %v2146
      %2242 = vmatpush1.bf16.msra.mxu0 %v2145
      %2243 = vmatprep.subr.bf16.mxu0 %v2148
      %2244 = vmatpush1.bf16.msra.mxu0 %v2147
      %2245 = vmatprep.subr.bf16.mxu0 %v2150
      %2246 = vmatpush1.bf16.msra.mxu0 %v2149
      %2247 = vmatprep.mubr.bf16.mxu0 %v1901
      %2248 = vmatmul.mubr.bf16.gmra.mrb[0].mxu0 %v1910
      %v2249 = vpop.f32.mrb[0].mxu0
      %v2250 = vadd.f32 %v1968, %v2249
      %v2251 = vpop.f32.mrb[0].mxu0
      %v2252 = vadd.f32 %v1972, %v2251
      %v2253 = vpop.f32.mrb[0].mxu0
      %v2254 = vadd.f32 %v1968, %v2253
      %v2255 = vpop.f32.mrb[0].mxu0
      %v2256 = vadd.f32 %v1972, %v2255
      %2257 = vdwg.mxu0
      %2258 = vmatprep.subr.bf16.mxu0 %v2152
      %2259 = vmatpush1.bf16.msra.mxu0 %v2151
      %2260 = vmatprep.subr.bf16.mxu0 %v2154
      %2261 = vmatpush1.bf16.msra.mxu0 %v2153
      %2262 = vmatprep.subr.bf16.mxu0 %v2156
      %2263 = vmatpush1.bf16.msra.mxu0 %v2155
      %2264 = vmatprep.subr.bf16.mxu0 %v2158
      %2265 = vmatpush1.bf16.msra.mxu0 %v2157
      %2266 = vmatprep.subr.bf16.mxu0 %v2160
      %2267 = vmatpush1.bf16.msra.mxu0 %v2159
      %2268 = vmatprep.subr.bf16.mxu0 %v2162
      %2269 = vmatpush1.bf16.msra.mxu0 %v2161
      %2270 = vmatprep.subr.bf16.mxu0 %v2164
      %2271 = vmatpush1.bf16.msra.mxu0 %v2163
      %2272 = vmatprep.subr.bf16.mxu0 %v2166
      %2273 = vmatpush1.bf16.msra.mxu0 %v2165
      %2274 = vmatprep.subr.bf16.mxu0 0
      %2275 = vmatpush1.bf16.msra.mxu0 0
      %2276 = vmatprep.subr.bf16.mxu0 0
      %2277 = vmatpush1.bf16.msra.mxu0 0
      %2278 = vmatprep.subr.bf16.mxu0 0
      %2279 = vmatpush1.bf16.msra.mxu0 0
      %2280 = vmatprep.subr.bf16.mxu0 0
      %2281 = vmatpush1.bf16.msra.mxu0 0
      %2282 = vmatprep.subr.bf16.mxu0 0
      %2283 = vmatpush1.bf16.msra.mxu0 0
      %2284 = vmatprep.subr.bf16.mxu0 0
      %2285 = vmatpush1.bf16.msra.mxu0 0
      %2286 = vmatprep.subr.bf16.mxu0 0
      %2287 = vmatpush1.bf16.msra.mxu0 0
      %2288 = vmatprep.subr.bf16.mxu0 0
      %2289 = vmatpush1.bf16.msra.mxu0 0
      %2290 = vmatprep.mubr.bf16.mxu0 0
      %2291 = vmatmul.mubr.bf16.gmra.mrb[0].mxu0 %v1914
      %v2292 = vpop.f32.mrb[0].mxu0
      %v2293 = vadd.f32 %v2250, %v2292
      %v2294 = vpop.f32.mrb[0].mxu0
      %v2295 = vadd.f32 %v2252, %v2294
      %v2296 = vpop.f32.mrb[0].mxu0
      %v2297 = vadd.f32 %v2254, %v2296
      %v2298 = vpop.f32.mrb[0].mxu0
      %v2299 = vadd.f32 %v2256, %v2298
      %2300 = vdwg.mxu0
      %v2301 = vld [vmem:[%s18] sm:$0xff]
      %vm2302 = vcmask 130048
      %v2304 = vsel %vm2302, %v2301, 0
      %2306 = vmatprep.subr.mxu0 %v2295
      %2307 = vmatpush1.msra.mxu0 %v2293
      %2308 = vmatprep.subr.mxu0 %v2299
      %2309 = vmatpush1.msra.mxu0 %v2297
      %2310 = vmatprep.subr.mxu0 0.0
      %2311 = vmatpush1.msra.mxu0 0.0
      %2312 = vmatprep.subr.mxu0 0.0
      %2313 = vmatpush1.msra.mxu0 0.0
      %2314 = vmatprep.subr.mxu0 0.0
      %2315 = vmatpush1.msra.mxu0 0.0
      %2316 = vmatprep.subr.mxu0 0.0
      %2317 = vmatpush1.msra.mxu0 0.0
      %2318 = vmatprep.subr.mxu0 0.0
      %2319 = vmatpush1.msra.mxu0 0.0
      %2320 = vmatprep.subr.mxu0 0.0
      %2321 = vmatpush1.msra.mxu0 0.0
      %2322 = vmatprep.subr.mxu0 0.0
      %2323 = vmatpush1.msra.mxu0 0.0
      %2324 = vmatprep.subr.mxu0 0.0
      %2325 = vmatpush1.msra.mxu0 0.0
      %2326 = vmatprep.subr.mxu0 0.0
      %2327 = vmatpush1.msra.mxu0 0.0
      %2328 = vmatprep.subr.mxu0 0.0
      %2329 = vmatpush1.msra.mxu0 0.0
      %2330 = vmatprep.subr.mxu0 0.0
      %2331 = vmatpush1.msra.mxu0 0.0
      %2332 = vmatprep.subr.mxu0 0.0
      %2333 = vmatpush1.msra.mxu0 0.0
      %2334 = vmatprep.subr.mxu0 0.0
      %2335 = vmatpush1.msra.mxu0 0.0
      %2336 = vmatprep.subr.mxu0 0.0
      %2337 = vmatpush1.msra.mxu0 0.0
      %2338 = vmatprep.subr.mxu0 0.0
      %2339 = vmatpush1.msra.mxu0 0.0
      %2340 = vmatprep.subr.mxu0 0.0
      %2341 = vmatpush1.msra.mxu0 0.0
      %2342 = vmatprep.subr.mxu0 0.0
      %2343 = vmatpush1.msra.mxu0 0.0
      %2344 = vmatprep.subr.mxu0 0.0
      %2345 = vmatpush1.msra.mxu0 0.0
      %2346 = vmatprep.subr.mxu0 0.0
      %2347 = vmatpush1.msra.mxu0 0.0
      %2348 = vmatprep.subr.mxu0 0.0
      %2349 = vmatpush1.msra.mxu0 0.0
      %2350 = vmatprep.subr.mxu0 0.0
      %2351 = vmatpush1.msra.mxu0 0.0
      %2352 = vmatprep.subr.mxu0 0.0
      %2353 = vmatpush1.msra.mxu0 0.0
      %2354 = vmatprep.subr.mxu0 0.0
      %2355 = vmatpush1.msra.mxu0 0.0
      %2356 = vmatprep.subr.mxu0 0.0
      %2357 = vmatpush1.msra.mxu0 0.0
      %2358 = vmatprep.subr.mxu0 0.0
      %2359 = vmatpush1.msra.mxu0 0.0
      %2360 = vmatprep.subr.mxu0 0.0
      %2361 = vmatpush1.msra.mxu0 0.0
      %2362 = vmatprep.subr.mxu0 0.0
      %2363 = vmatpush1.msra.mxu0 0.0
      %2364 = vmatprep.subr.mxu0 0.0
      %2365 = vmatpush1.msra.mxu0 0.0
      %2366 = vmatprep.subr.mxu0 0.0
      %2367 = vmatpush1.msra.mxu0 0.0
      %2368 = vmatprep.subr.mxu0 0.0
      %2369 = vmatpush1.msra.mxu0 0.0
      %2370 = vmatprep.mubr.f32.mxu0 0.0
      %2371 = vmatmul.mubr.f32.gmra.mrb[0].mxu0 %v2304
      %v2372 = vpop.f32.mrb[0].mxu0
      %v2373 = vadd.f32 0.0, %v2372
      %v2374 = vpop.f32.mrb[0].mxu0
      %v2375 = vadd.f32 0.0, %v2374
      %2376 = vdwg.mxu0
      %v2377 = vld [vmem:[%s19] sm:$0xff]
      %v2378 = vld [vmem:[%s19 + $0x8] sm:$0xff]
      %v2379 = vld [vmem:[%s19 + $0x10] sm:$0xff]
      %v2380 = vld [vmem:[%s19 + $0x18] sm:$0xff]
      %v2381 = vld [vmem:[%s19 + $0x20] sm:$0xff]
      %v2382 = vld [vmem:[%s19 + $0x28] sm:$0xff]
      %v2383 = vld [vmem:[%s19 + $0x30] sm:$0xff]
      %v2384 = vld [vmem:[%s19 + $0x38] sm:$0xff]
      %v2385 = vld [vmem:[%s19 + $0x40] sm:$0xff]
      %v2386 = vld [vmem:[%s19 + $0x48] sm:$0xff]
      %v2387 = vld [vmem:[%s19 + $0x50] sm:$0xff]
      %v2388 = vld [vmem:[%s19 + $0x58] sm:$0xff]
      %v2389 = vld [vmem:[%s19 + $0x60] sm:$0xff]
      %v2390 = vld [vmem:[%s19 + $0x68] sm:$0xff]
      %v2391 = vld [vmem:[%s19 + $0x70] sm:$0xff]
      %v2392 = vld [vmem:[%s19 + $0x78] sm:$0xff]
      %v2393 = vld [vmem:[%s19 + $0x80] sm:$0xff]
      %v2394 = vld [vmem:[%s19 + $0x88] sm:$0xff]
      %v2395 = vld [vmem:[%s19 + $0x90] sm:$0xff]
      %v2396 = vld [vmem:[%s19 + $0x98] sm:$0xff]
      %v2397 = vld [vmem:[%s19 + $0xa0] sm:$0xff]
      %v2398 = vld [vmem:[%s19 + $0xa8] sm:$0xff]
      %v2399 = vld [vmem:[%s19 + $0xb0] sm:$0xff]
      %v2400 = vld [vmem:[%s19 + $0xb8] sm:$0xff]
      %v2401 = vld [vmem:[%s19 + $0xc0] sm:$0xff]
      %v2402 = vld [vmem:[%s19 + $0xc8] sm:$0xff]
      %v2403 = vld [vmem:[%s19 + $0xd0] sm:$0xff]
      %v2404 = vld [vmem:[%s19 + $0xd8] sm:$0xff]
      %v2405 = vld [vmem:[%s19 + $0xe0] sm:$0xff]
      %v2406 = vld [vmem:[%s19 + $0xe8] sm:$0xff]
      %v2407 = vld [vmem:[%s19 + $0xf0] sm:$0xff]
      %v2408 = vld [vmem:[%s19 + $0xf8] sm:$0xff]
      %2409 = vmatprep.subr.mxu0 0.0
      %2410 = vmatpush1.msra.mxu0 %v2377
      %2411 = vmatprep.subr.mxu0 0.0
      %2412 = vmatpush1.msra.mxu0 %v2378
      %2413 = vmatprep.subr.mxu0 0.0
      %2414 = vmatpush1.msra.mxu0 %v2379
      %2415 = vmatprep.subr.mxu0 0.0
      %2416 = vmatpush1.msra.mxu0 %v2380
      %2417 = vmatprep.subr.mxu0 0.0
      %2418 = vmatpush1.msra.mxu0 %v2381
      %2419 = vmatprep.subr.mxu0 0.0
      %2420 = vmatpush1.msra.mxu0 %v2382
      %2421 = vmatprep.subr.mxu0 0.0
      %2422 = vmatpush1.msra.mxu0 %v2383
      %2423 = vmatprep.subr.mxu0 0.0
      %2424 = vmatpush1.msra.mxu0 %v2384
      %2425 = vmatprep.subr.mxu0 0.0
      %2426 = vmatpush1.msra.mxu0 %v2385
      %2427 = vmatprep.subr.mxu0 0.0
      %2428 = vmatpush1.msra.mxu0 %v2386
      %2429 = vmatprep.subr.mxu0 0.0
      %2430 = vmatpush1.msra.mxu0 %v2387
      %2431 = vmatprep.subr.mxu0 0.0
      %2432 = vmatpush1.msra.mxu0 %v2388
      %2433 = vmatprep.subr.mxu0 0.0
      %2434 = vmatpush1.msra.mxu0 %v2389
      %2435 = vmatprep.subr.mxu0 0.0
      %2436 = vmatpush1.msra.mxu0 %v2390
      %2437 = vmatprep.subr.mxu0 0.0
      %2438 = vmatpush1.msra.mxu0 %v2391
      %2439 = vmatprep.subr.mxu0 0.0
      %2440 = vmatpush1.msra.mxu0 %v2392
      %2441 = vmatprep.subr.mxu0 0.0
      %2442 = vmatpush1.msra.mxu0 %v2393
      %2443 = vmatprep.subr.mxu0 0.0
      %2444 = vmatpush1.msra.mxu0 %v2394
      %2445 = vmatprep.subr.mxu0 0.0
      %2446 = vmatpush1.msra.mxu0 %v2395
      %2447 = vmatprep.subr.mxu0 0.0
      %2448 = vmatpush1.msra.mxu0 %v2396
      %2449 = vmatprep.subr.mxu0 0.0
      %2450 = vmatpush1.msra.mxu0 %v2397
      %2451 = vmatprep.subr.mxu0 0.0
      %2452 = vmatpush1.msra.mxu0 %v2398
      %2453 = vmatprep.subr.mxu0 0.0
      %2454 = vmatpush1.msra.mxu0 %v2399
      %2455 = vmatprep.subr.mxu0 0.0
      %2456 = vmatpush1.msra.mxu0 %v2400
      %2457 = vmatprep.subr.mxu0 0.0
      %2458 = vmatpush1.msra.mxu0 %v2401
      %2459 = vmatprep.subr.mxu0 0.0
      %2460 = vmatpush1.msra.mxu0 %v2402
      %2461 = vmatprep.subr.mxu0 0.0
      %2462 = vmatpush1.msra.mxu0 %v2403
      %2463 = vmatprep.subr.mxu0 0.0
      %2464 = vmatpush1.msra.mxu0 %v2404
      %2465 = vmatprep.subr.mxu0 0.0
      %2466 = vmatpush1.msra.mxu0 %v2405
      %2467 = vmatprep.subr.mxu0 0.0
      %2468 = vmatpush1.msra.mxu0 %v2406
      %2469 = vmatprep.subr.mxu0 0.0
      %2470 = vmatpush1.msra.mxu0 %v2407
      %2471 = vmatprep.subr.mxu0 0.0
      %2472 = vmatpush1.msra.mxu0 %v2408
      %2473 = vmatprep.mubr.f32.mxu0 %v2375
      %2474 = vmatmul.mubr.f32.gmra.mrb[0].mxu0 %v2373
      %v2475 = vpop.f32.mrb[0].mxu0
      %v2476 = vadd.f32 0.0, %v2475
      %v2477 = vpop.f32.mrb[0].mxu0
      %2478 = vdwg.mxu0
      %v2479 = vmul.f32 %v2476, 0.11111111
      %v2480 = vxor.u32 %v2479, 2147483648
      %v2481 = vmul.f32 %v2480, 1.442695
      %v2482 = vpow.pop %v2481
      %v2483 = vadd.f32 %v2482, 1.0
      %v2484 = vrcp.pop %v2483
      %v2485 = vmul.f32 1.0, %v2484
      %v2486 = vmul.f32 %v2479, %v2485
      %2487 = vst [vmem:[%s641] sm:$0xff] %v2486
      %p2488 = scmp.lt.s32.totalorder %s31, 1
      %s2489 = scalar_select %p2488, %s31, 1
      %s2490 = smul.addr %s2489, 8
      %s2491 = scalar_lea.vmem %s20, %s2490
      // Predicated region
      $region101: #{cond_res_block.1} parent=99 // pred_check
        %p2492 = pneg %p479
      $region102: #{cond_res_block.1} parent=99 // pred_check_branch
        %2494 = sbr.rel (%p2492) target = $region104
      $region103: #{cond_res_block.1} parent=99 // pred_region
        _
      $region104: #{cond_res_block.1} parent=99 // pred_fallthru
        _
    $region100: #{cond_res_block.1} parent=5 // pred_fallthru
      _
    %p2495 = scmp.le.s32.totalorder 2, %s26
    // Predicated region
    $region105: #{cond_res_block.1} parent=5 // pred_check
      %p2496 = pneg %p2495
    $region106: #{cond_res_block.1} parent=5 // pred_check_branch
      %2498 = sbr.rel (%p2496) target = $region108
    $region107: #{cond_res_block.1} parent=5 // pred_region
      %s2499 = ssub.s32 %s26, 2
      // Predicated region
      $region109: #{cond_res_block.1} parent=107 // pred_check
        %p2500 = pneg %p485
      $region110: #{cond_res_block.1} parent=107 // pred_check_branch
        %2502 = sbr.rel (%p2500) target = $region112
      $region111: #{cond_res_block.1} parent=107 // pred_region
        %p2503 = scmp.lt.s32.totalorder %s32, 1
        %s2504 = scalar_select %p2503, %s32, 1
        %s2505 = smul.addr %s2504, 8
        %s2506 = scalar_lea.vmem %s20, %s2505
      $region112: #{cond_res_block.1} parent=107 // pred_fallthru
        _
    $region108: #{cond_res_block.1} parent=5 // pred_fallthru
      _
  $region6: #{cond_res_block.1} parent=0 // loop_footer
    %s30 = sadd.s32 1, %s26
  $region7: #{cond_res_block.1} parent=0 // loop_footer_branch
    %25 = sbr.rel target = $region3
  $region8: #{cond_res_block.1} parent=0 // loop_exit
    _

</llo_original>
